<compile_context>
chip_gen: v7x
topology: tpu7x:2x2x1
jax: 0.10.0
libtpu: 0.0.40
codegen_flags: <defaults>
</compile_context>

<pallas_src>
import functools

import jax
import jax.numpy as jnp
from jax import lax
from jax.experimental import pallas as pl
from jax.experimental.pallas import tpu as pltpu
import numpy as np

# ----------------------------- hyperparameters -----------------------------
B, T = 8, 8            # batch, sequence length (B=8 fills the 8 vreg sublanes)
E = 32                 # "bert hidden_size" (embedding_dim)
H = 16                 # GRU hidden_dim  (2*H == E so layer-0/layer-1 inputs stack)
L = 2                  # n_layers
O = 1                  # output_dim
VOCAB = 100
N_HEADS = 2
HEAD_D = E // N_HEADS
OPAD = 128             # lane-dense padded head width (keep >= 128; unmasked vst)

assert E == 2 * H, "layer-1 input dim (2H) must equal E so the packed weights stack"


# ------------------------- synthetic frozen "BERT" -------------------------
# TODO(synk): pretrained bert-base-uncased weights cannot be loaded here; a
# small deterministic synthetic encoder (emb + 1 transformer layer) stands in
# for the frozen `with torch.no_grad(): bert(text)[0]` feature extractor.
def layer_norm(x, g, b, eps=1e-12):
    mu = x.mean(-1, keepdims=True)
    var = ((x - mu) ** 2).mean(-1, keepdims=True)
    return (x - mu) * lax.rsqrt(var + eps) * g + b


def synthetic_bert(text, p):
    x = p["tok_emb"][text] + p["pos_emb"][:text.shape[1]][None]      # (B,T,E)
    x = layer_norm(x, p["ln0_g"], p["ln0_b"])
    q, k, v = x @ p["wq"], x @ p["wk"], x @ p["wv"]

    def split(a):
        return a.reshape(B, T, N_HEADS, HEAD_D).transpose(0, 2, 1, 3)

    qh, kh, vh = split(q), split(k), split(v)
    att = jax.nn.softmax(qh @ kh.transpose(0, 1, 3, 2) / jnp.sqrt(float(HEAD_D)), axis=-1)
    ctx = (att @ vh).transpose(0, 2, 1, 3).reshape(B, T, E)
    x = layer_norm(x + ctx @ p["wo"], p["ln1_g"], p["ln1_b"])
    x = layer_norm(x + jax.nn.gelu(x @ p["w1"]) @ p["w2"], p["ln2_g"], p["ln2_b"])
    return x                                                          # (B,T,E)


# ----------------------------- Pallas kernel -------------------------------
def gru_head_kernel(embf_ref, embr_ref, wf_ref, wb_ref, wh_ref, bx_ref, bhn_ref,
                    wout_ref, bout_ref, out_ref, g_scr, x1_scr, *, seq_len, batch):
    # embf_ref : (T*B, E)  bf16   time-major rows (row = t*B + b)
    # embr_ref : (T*B, E)  bf16   time-REVERSED rows (row = (T-1-t)*B + b)
    # wf_ref   : (L, IN, 6H) bf16  fwd input proj, cols [r_f|.|z_f|.|n_f|.]
    # wb_ref   : (L, IN, 6H) bf16  bwd input proj, cols [.|r_b|.|z_b|.|n_b]
    # wh_ref   : (L, 2H, 6H) bf16  block-diag hidden proj (rows 0:H fwd, H:2H bwd)
    # bx_ref   : (L, 1, 6H)  f32   b_ih (+ b_hh folded for r/z), packed columns
    # bhn_ref  : (L, B, 2H)  f32   b_hn per direction, pre-broadcast to B rows
    # wout/bout: (2H, 128) / (1, 128) f32, zero-padded lane-dense head
    # g_scr    : (T*B, 6H)  f32 scratch — hoisted gate pre-activations
    # x1_scr   : (T*B, 2H)  f32 scratch — layer-1 input [h0_f[t] | h0_b[t]]
    Tn, Bn = seq_len, batch
    H2 = x1_scr.shape[-1]          # 2H (packed fwd|bwd hidden width)
    Hn = H2 // 2

    def hoist(layer, xf_bf16, xr_bf16):
        # Hoisted input-to-hidden projection for one layer: one (T*B, IN) @
        # (IN, 6H) bf16 matmul per direction with f32 accumulation, done ONCE,
        # OFF the serial recurrence.  Because the bwd matmul consumes the
        # time-reversed input, row slab s of g_scr holds exactly the gate
        # pre-activations both directions need at step s, already lane-packed
        # as [r_f | r_b | z_f | z_b | n_f | n_b].  Folded biases included.
        g_scr[...] = (
            jnp.dot(xf_bf16, wf_ref[layer], preferred_element_type=jnp.float32)
            + jnp.dot(xr_bf16, wb_ref[layer], preferred_element_type=jnp.float32)
            + bx_ref[layer])

    def run_layer(layer, store_x1):
        wh = wh_ref[layer]             # (2H, 6H) bf16 block-diagonal
        bhn = bhn_ref[layer]           # (B, 2H) f32, pre-broadcast (no per-step bcast)
        h = jnp.zeros((Bn, H2), jnp.float32)        # packed [h_f | h_b]
        # Fused fwd/bwd recurrence.  Per step: one scratch load, ONE bf16 MXU
        # matmul (both directions, all 3 gates, N=6H=96 lanes), ONE sigmoid on
        # the packed r|z tile, ONE tanh on the packed n tile, f32 VPU updates.
        # All per-step intermediates come from / go to scratch, so only the
        # (B, 2H) carry stays live across steps (no vreg-file spills).
        for s in range(Tn):
            g = g_scr[s * Bn:(s + 1) * Bn, :]                      # (B, 6H) f32
            gh = jnp.dot(h.astype(jnp.bfloat16), wh,
                         preferred_element_type=jnp.float32)       # (B, 6H) f32
            rz = jax.nn.sigmoid(g[:, :4 * Hn] + gh[:, :4 * Hn])    # [r_f|r_b|z_f|z_b]
            r = rz[:, :H2]                                         # (B, 2H) packed
            z = rz[:, H2:]                                         # (B, 2H) packed
            n = jnp.tanh(g[:, 4 * Hn:] + r * (gh[:, 4 * Hn:] + bhn))
            h = (1.0 - z) * n + z * h
            if store_x1:
                # Layer-1 input assembled in place: h_f belongs to time s,
                # h_b to time T-1-s (two half-lane stores per step; the per-
                # step Python-list concat of the old version is gone).
                tf, tb = s, Tn - 1 - s
                x1_scr[tf * Bn:(tf + 1) * Bn, :Hn] = h[:, :Hn]
                x1_scr[tb * Bn:(tb + 1) * Bn, Hn:] = h[:, Hn:]
        return h

    # ---- layer 0: input = frozen-BERT embeddings (time-major 2-D, bf16) ----
    hoist(0, embf_ref[...], embr_ref[...])
    run_layer(0, store_x1=True)

    # ---- layer 1: input = [h0_f[t] | h0_b[t]] from scratch ------------------
    x1 = x1_scr[...]                                               # (T*B, 2H) f32
    # One-time (off the serial chain) time-slab reversal for the bwd matmul.
    x1r = jnp.concatenate(
        [x1[(Tn - 1 - t) * Bn:(Tn - t) * Bn, :] for t in range(Tn)], axis=0)
    hoist(1, x1.astype(jnp.bfloat16), x1r.astype(jnp.bfloat16))
    h1 = run_layer(1, store_x1=False)

    # hidden[-2] ++ hidden[-1] == packed [h1_f | h1_b] == h1 (concat is free).
    # Dropout is an eval-mode identity.  wout/bout are zero-padded to 128
    # lanes so the final store is a full-lane (unmasked) vst; the wrapper
    # slices back to O.  Head matmul kept f32 (one-off, off-chain).
    out_ref[...] = (jnp.dot(h1, wout_ref[...],
                            preferred_element_type=jnp.float32) + bout_ref[...])


# --------------------------- weight repacking (wrapper) ---------------------
def pack_gru_params(wih_t, whh_t, bih, bhh, wout_t, bout):
    # wih_t: (2L, IN, 3H) columns [r|z|n]; whh_t: (2L, H, 3H); bih/bhh: (2L,1,3H)
    Hn = whh_t.shape[1]
    INn = wih_t.shape[1]
    On = wout_t.shape[1]

    def gcol(a, d, g):                       # gate-g column block of direction d
        return a[d, :, g * Hn:(g + 1) * Hn]

    z_in = jnp.zeros((INn, Hn), jnp.float32)
    z_h = jnp.zeros((Hn, Hn), jnp.float32)

    wf_l, wb_l, wh_l, bx_l, bhn_l = [], [], [], [], []
    for l in range(L):
        f, b = 2 * l, 2 * l + 1
        # packed gate column order: [r_f | r_b | z_f | z_b | n_f | n_b]
        wf_l.append(jnp.concatenate(
            [gcol(wih_t, f, 0), z_in, gcol(wih_t, f, 1), z_in,
             gcol(wih_t, f, 2), z_in], axis=1))
        wb_l.append(jnp.concatenate(
            [z_in, gcol(wih_t, b, 0), z_in, gcol(wih_t, b, 1),
             z_in, gcol(wih_t, b, 2)], axis=1))
        top = jnp.concatenate(
            [gcol(whh_t, f, 0), z_h, gcol(whh_t, f, 1), z_h,
             gcol(whh_t, f, 2), z_h], axis=1)
        bot = jnp.concatenate(
            [z_h, gcol(whh_t, b, 0), z_h, gcol(whh_t, b, 1),
             z_h, gcol(whh_t, b, 2)], axis=1)
        wh_l.append(jnp.concatenate([top, bot], axis=0))            # (2H, 6H)
        # Fold b_hh into the hoisted projection for r/z; b_hn must stay inside
        # r * (W_hn h + b_hn) per torch.nn.GRU.
        bx_l.append(jnp.concatenate(
            [gcol(bih, f, 0) + gcol(bhh, f, 0), gcol(bih, b, 0) + gcol(bhh, b, 0),
             gcol(bih, f, 1) + gcol(bhh, f, 1), gcol(bih, b, 1) + gcol(bhh, b, 1),
             gcol(bih, f, 2), gcol(bih, b, 2)], axis=1))             # (1, 6H)
        bhn_l.append(jnp.concatenate([gcol(bhh, f, 2), gcol(bhh, b, 2)], axis=1))

    wf_pack = jnp.stack(wf_l).astype(jnp.bfloat16)                   # (L, IN, 6H)
    wb_pack = jnp.stack(wb_l).astype(jnp.bfloat16)                   # (L, IN, 6H)
    wh_pack = jnp.stack(wh_l).astype(jnp.bfloat16)                   # (L, 2H, 6H)
    bx_pack = jnp.stack(bx_l)                                        # (L, 1, 6H)
    # pre-broadcast b_hn once (outside the kernel) — no per-cell broadcast_in_dim
    bhn_pack = jnp.broadcast_to(jnp.stack(bhn_l), (L, B, 2 * Hn))    # (L, B, 2H)

    wout_pad = jnp.zeros((2 * Hn, OPAD), jnp.float32).at[:, :On].set(wout_t)
    bout_pad = jnp.zeros((1, OPAD), jnp.float32).at[:, :On].set(bout)
    return wf_pack, wb_pack, wh_pack, bx_pack, bhn_pack, wout_pad, bout_pad


def gru_head_pallas(emb_tbe, wih_t, whh_t, bih, bhh, wout_t, bout):
    Tn, Bn, En = emb_tbe.shape
    Hn = whh_t.shape[1]
    On = wout_t.shape[1]

    (wf_pack, wb_pack, wh_pack, bx_pack, bhn_pack,
     wout_pad, bout_pad) = pack_gru_params(wih_t, whh_t, bih, bhh, wout_t, bout)

    # Time-major 2-D activations (forward and time-reversed) in bf16 for the
    # hoisted MXU matmuls; accumulation and all gate math stay f32 in-kernel.
    emb_f = emb_tbe.reshape(Tn * Bn, En).astype(jnp.bfloat16)
    emb_r = emb_tbe[::-1].reshape(Tn * Bn, En).astype(jnp.bfloat16)

    kernel = functools.partial(gru_head_kernel, seq_len=Tn, batch=Bn)

    out_pad = pl.pallas_call(
        kernel,
        out_shape=jax.ShapeDtypeStruct((Bn, OPAD), jnp.float32),
        in_specs=[pl.BlockSpec(memory_space=pltpu.MemorySpace.VMEM)] * 9,
        out_specs=pl.BlockSpec(memory_space=pltpu.MemorySpace.VMEM),
        scratch_shapes=[
            pltpu.VMEM((Tn * Bn, 6 * Hn), jnp.float32),   # hoisted gate slab
            pltpu.VMEM((Tn * Bn, 2 * Hn), jnp.float32),   # layer-1 input
        ],
    )(emb_f, emb_r, wf_pack, wb_pack, wh_pack, bx_pack, bhn_pack,
      wout_pad, bout_pad)
    return out_pad[:, :On]


# --------------------------- pure-JAX reference -----------------------------
def gru_head_ref(emb_tbe, wih_t, whh_t, bih, bhh, wout_t, bout,
                 mxu_dtype=jnp.float32):
    # mxu_dtype mirrors the kernel's precision policy (bf16 operands on the
    # input AND hidden projections, f32 accumulate / gate math).
    def run_dir(x_seq, wih, whh, bi, bh, reverse):
        h = jnp.zeros((x_seq.shape[1], H), jnp.float32)
        outs = [None] * T
        order = range(T - 1, -1, -1) if reverse else range(T)
        for t in order:
            gx = jnp.dot(x_seq[t].astype(mxu_dtype), wih.astype(mxu_dtype),
                         preferred_element_type=jnp.float32) + bi
            gh = jnp.dot(h.astype(mxu_dtype), whh.astype(mxu_dtype),
                         preferred_element_type=jnp.float32) + bh
            r = jax.nn.sigmoid(gx[:, :H] + gh[:, :H])
            z = jax.nn.sigmoid(gx[:, H:2 * H] + gh[:, H:2 * H])
            n = jnp.tanh(gx[:, 2 * H:] + r * gh[:, 2 * H:])
            h = (1.0 - z) * n + z * h
            outs[t] = h
        return jnp.stack(outs), h

    x = emb_tbe
    for l in range(L):
        of, hf = run_dir(x, wih_t[2 * l], whh_t[2 * l], bih[2 * l], bhh[2 * l], False)
        ob, hb = run_dir(x, wih_t[2 * l + 1], whh_t[2 * l + 1],
                         bih[2 * l + 1], bhh[2 * l + 1], True)
        x = jnp.concatenate([of, ob], axis=-1)
    hid = jnp.concatenate([hf, hb], axis=1)
    return hid @ wout_t + bout


# ----------------------------- parameter init -------------------------------
def init_params(key):
    keys = iter(jax.random.split(key, 64))
    rnd = lambda shape, s=0.1: (s * jax.random.normal(next(keys), shape)).astype(jnp.float32)

    bert = {
        "tok_emb": rnd((VOCAB, E)), "pos_emb": rnd((T, E)),
        "ln0_g": jnp.ones((E,), jnp.float32), "ln0_b": jnp.zeros((E,), jnp.float32),
        "wq": rnd((E, E)), "wk": rnd((E, E)), "wv": rnd((E, E)), "wo": rnd((E, E)),
        "ln1_g": jnp.ones((E,), jnp.float32), "ln1_b": jnp.zeros((E,), jnp.float32),
        "w1": rnd((E, 2 * E)), "w2": rnd((2 * E, E)),
        "ln2_g": jnp.ones((E,), jnp.float32), "ln2_b": jnp.zeros((E,), jnp.float32),
    }
    # GRU weights, PyTorch layout (3H, in) / (3H, H), stored transposed for x @ W.
    # index = 2*layer + direction; layer-0 input = E, layer-1 input = 2H (== E here).
    wih_t = jnp.stack([rnd((E, 3 * H)) for _ in range(2 * L)])        # (2L, E, 3H)
    whh_t = jnp.stack([rnd((H, 3 * H)) for _ in range(2 * L)])        # (2L, H, 3H)
    bih = jnp.stack([rnd((1, 3 * H)) for _ in range(2 * L)])          # (2L, 1, 3H)
    bhh = jnp.stack([rnd((1, 3 * H)) for _ in range(2 * L)])          # (2L, 1, 3H)
    wout_t = rnd((2 * H, O))                                          # Linear(2H, O).T
    bout = rnd((1, O))
    return bert, (wih_t, whh_t, bih, bhh, wout_t, bout)


# ---------------------------------- main ------------------------------------
if __name__ == "__main__":
    key = jax.random.PRNGKey(0)
    k_param, k_text = jax.random.split(key)
    bert_p, gru_p = init_params(k_param)

    text = jax.random.randint(k_text, (B, T), 0, VOCAB, dtype=jnp.int32)

    # frozen feature extractor (plain JAX glue, `torch.no_grad()` semantics)
    embedded = synthetic_bert(text, bert_p)                # (B, T, E)
    emb_tbe = jnp.transpose(embedded, (1, 0, 2))           # (T, B, E) time-major

    out = gru_head_pallas(emb_tbe, *gru_p)                 # (B, O)
    out = jax.block_until_ready(out)

    # Tight check vs. a reference using the same MXU precision policy
    # (bf16 operands on input AND hidden projections, f32 everything else).
    ref_bf16 = gru_head_ref(emb_tbe, *gru_p, mxu_dtype=jnp.bfloat16)
    np.testing.assert_allclose(np.asarray(out), np.asarray(ref_bf16),
                               rtol=2e-3, atol=2e-3)
    # Loose sanity check vs. the all-f32 torch.nn.GRU math (bf16 operand
    # rounding on the MXU matmuls is the only difference).
    ref_f32 = gru_head_ref(emb_tbe, *gru_p)
    np.testing.assert_allclose(np.asarray(out), np.asarray(ref_f32),
                               rtol=5e-2, atol=5e-2)

    print("KERNEL_OK")
</pallas_src>

<mosaic_0001>
module attributes {stable_mosaic.version = 11 : i64} {
  func.func @gru_head_kernel(%arg0: memref<64x32xbf16, #tpu.memory_space<vmem>>, %arg1: memref<64x32xbf16, #tpu.memory_space<vmem>>, %arg2: memref<2x32x96xbf16, #tpu.memory_space<vmem>>, %arg3: memref<2x32x96xbf16, #tpu.memory_space<vmem>>, %arg4: memref<2x32x96xbf16, #tpu.memory_space<vmem>>, %arg5: memref<2x1x96xf32, #tpu.memory_space<vmem>>, %arg6: memref<2x8x32xf32, #tpu.memory_space<vmem>>, %arg7: memref<32x128xf32, #tpu.memory_space<vmem>>, %arg8: memref<1x128xf32, #tpu.memory_space<vmem>>, %arg9: memref<8x128xf32, #tpu.memory_space<vmem>>, %arg10: memref<64x96xf32, #tpu.memory_space<vmem>>, %arg11: memref<64x32xf32, #tpu.memory_space<vmem>>) attributes {dimension_semantics = [], scalar_prefetch = 0 : i64, scratch_operands = 2 : i64, tpu.core_type = #tpu.core_type<tc>} {
    %c0 = arith.constant 0 : index
    %c0_0 = arith.constant 0 : index
    %0 = vector.load %arg0[%c0, %c0_0] : memref<64x32xbf16, #tpu.memory_space<vmem>>, vector<64x32xbf16>
    %c0_1 = arith.constant 0 : index
    %c0_2 = arith.constant 0 : index
    %1 = vector.load %arg1[%c0_1, %c0_2] : memref<64x32xbf16, #tpu.memory_space<vmem>>, vector<64x32xbf16>
    %c0_3 = arith.constant 0 : index
    %c0_4 = arith.constant 0 : index
    %c0_5 = arith.constant 0 : index
    %2 = vector.load %arg2[%c0_3, %c0_4, %c0_5] : memref<2x32x96xbf16, #tpu.memory_space<vmem>>, vector<1x32x96xbf16>
    %3 = vector.shape_cast %2 : vector<1x32x96xbf16> to vector<32x96xbf16>
    %cst = arith.constant dense<0.000000e+00> : vector<64x96xf32>
    %4 = tpu.matmul %0, %3, %cst {dimension_numbers = #tpu.dot_dimension_numbers<[1], [0], [0], [1], [0, 0, 1, 1], [], []>} : vector<64x32xbf16>, vector<32x96xbf16>, vector<64x96xf32> -> vector<64x96xf32>
    %c0_6 = arith.constant 0 : index
    %c0_7 = arith.constant 0 : index
    %c0_8 = arith.constant 0 : index
    %5 = vector.load %arg3[%c0_6, %c0_7, %c0_8] : memref<2x32x96xbf16, #tpu.memory_space<vmem>>, vector<1x32x96xbf16>
    %6 = vector.shape_cast %5 : vector<1x32x96xbf16> to vector<32x96xbf16>
    %cst_9 = arith.constant dense<0.000000e+00> : vector<64x96xf32>
    %7 = tpu.matmul %1, %6, %cst_9 {dimension_numbers = #tpu.dot_dimension_numbers<[1], [0], [0], [1], [0, 0, 1, 1], [], []>} : vector<64x32xbf16>, vector<32x96xbf16>, vector<64x96xf32> -> vector<64x96xf32>
    %8 = arith.addf %4, %7 : vector<64x96xf32>
    %c0_10 = arith.constant 0 : index
    %c0_11 = arith.constant 0 : index
    %c0_12 = arith.constant 0 : index
    %9 = vector.load %arg5[%c0_10, %c0_11, %c0_12] : memref<2x1x96xf32, #tpu.memory_space<vmem>>, vector<1x1x96xf32>
    %10 = vector.shape_cast %9 : vector<1x1x96xf32> to vector<1x96xf32>
    %11 = vector.broadcast %10 : vector<1x96xf32> to vector<64x96xf32>
    %12 = arith.addf %8, %11 : vector<64x96xf32>
    %c0_13 = arith.constant 0 : index
    %c0_14 = arith.constant 0 : index
    %13 = vector.load %arg10[%c0_13, %c0_14] : memref<64x96xf32, #tpu.memory_space<vmem>>, vector<64x96xf32>
    tpu.vector_store %arg10[%c0_13, %c0_14], %12 {strides = array<i32>} : memref<64x96xf32, #tpu.memory_space<vmem>>, vector<64x96xf32>,
    %c0_15 = arith.constant 0 : index
    %c0_16 = arith.constant 0 : index
    %c0_17 = arith.constant 0 : index
    %14 = vector.load %arg4[%c0_15, %c0_16, %c0_17] : memref<2x32x96xbf16, #tpu.memory_space<vmem>>, vector<1x32x96xbf16>
    %15 = vector.shape_cast %14 : vector<1x32x96xbf16> to vector<32x96xbf16>
    %c0_18 = arith.constant 0 : index
    %c0_19 = arith.constant 0 : index
    %c0_20 = arith.constant 0 : index
    %16 = vector.load %arg6[%c0_18, %c0_19, %c0_20] : memref<2x8x32xf32, #tpu.memory_space<vmem>>, vector<1x8x32xf32>
    %17 = vector.shape_cast %16 : vector<1x8x32xf32> to vector<8x32xf32>
    %cst_21 = arith.constant 0.000000e+00 : f32
    %18 = vector.broadcast %cst_21 : f32 to vector<8x32xf32>
    %c0_22 = arith.constant 0 : index
    %c0_23 = arith.constant 0 : index
    %19 = vector.load %arg10[%c0_22, %c0_23] : memref<64x96xf32, #tpu.memory_space<vmem>>, vector<8x96xf32>
    %20 = arith.truncf %18 : vector<8x32xf32> to vector<8x32xbf16>
    %cst_24 = arith.constant dense<0.000000e+00> : vector<8x96xf32>
    %21 = tpu.matmul %20, %15, %cst_24 {dimension_numbers = #tpu.dot_dimension_numbers<[1], [0], [0], [1], [0, 0, 1, 1], [], []>} : vector<8x32xbf16>, vector<32x96xbf16>, vector<8x96xf32> -> vector<8x96xf32>
    %22 = vector.extract_strided_slice %19 {offsets = [0, 0], sizes = [8, 64], strides = [1, 1]} : vector<8x96xf32> to vector<8x64xf32>
    %23 = vector.extract_strided_slice %21 {offsets = [0, 0], sizes = [8, 64], strides = [1, 1]} : vector<8x96xf32> to vector<8x64xf32>
    %24 = arith.addf %22, %23 : vector<8x64xf32>
    %25 = arith.negf %24 : vector<8x64xf32>
    %26 = math.exp %25 : vector<8x64xf32>
    %cst_25 = arith.constant 1.000000e+00 : f32
    %27 = vector.broadcast %cst_25 : f32 to vector<8x64xf32>
    %28 = arith.addf %27, %26 : vector<8x64xf32>
    %29 = arith.divf %27, %28 : vector<8x64xf32>
    %30 = vector.extract_strided_slice %29 {offsets = [0, 0], sizes = [8, 32], strides = [1, 1]} : vector<8x64xf32> to vector<8x32xf32>
    %31 = vector.extract_strided_slice %29 {offsets = [0, 32], sizes = [8, 32], strides = [1, 1]} : vector<8x64xf32> to vector<8x32xf32>
    %32 = vector.extract_strided_slice %19 {offsets = [0, 64], sizes = [8, 32], strides = [1, 1]} : vector<8x96xf32> to vector<8x32xf32>
    %33 = vector.extract_strided_slice %21 {offsets = [0, 64], sizes = [8, 32], strides = [1, 1]} : vector<8x96xf32> to vector<8x32xf32>
    %34 = arith.addf %33, %17 : vector<8x32xf32>
    %35 = arith.mulf %30, %34 : vector<8x32xf32>
    %36 = arith.addf %32, %35 : vector<8x32xf32>
    %37 = math.tanh %36 : vector<8x32xf32>
    %cst_26 = arith.constant 1.000000e+00 : f32
    %38 = vector.broadcast %cst_26 : f32 to vector<8x32xf32>
    %39 = arith.subf %38, %31 : vector<8x32xf32>
    %40 = arith.mulf %39, %37 : vector<8x32xf32>
    %41 = arith.mulf %31, %18 : vector<8x32xf32>
    %42 = arith.addf %40, %41 : vector<8x32xf32>
    %43 = vector.extract_strided_slice %42 {offsets = [0, 0], sizes = [8, 16], strides = [1, 1]} : vector<8x32xf32> to vector<8x16xf32>
    %c0_27 = arith.constant 0 : index
    %c0_28 = arith.constant 0 : index
    %44 = vector.load %arg11[%c0_27, %c0_28] : memref<64x32xf32, #tpu.memory_space<vmem>>, vector<8x16xf32>
    tpu.vector_store %arg11[%c0_27, %c0_28], %43 {strides = array<i32>} : memref<64x32xf32, #tpu.memory_space<vmem>>, vector<8x16xf32>,
    %45 = vector.extract_strided_slice %42 {offsets = [0, 16], sizes = [8, 16], strides = [1, 1]} : vector<8x32xf32> to vector<8x16xf32>
    %c56 = arith.constant 56 : index
    %c16 = arith.constant 16 : index
    %46 = vector.load %arg11[%c56, %c16] : memref<64x32xf32, #tpu.memory_space<vmem>>, vector<8x16xf32>
    tpu.vector_store %arg11[%c56, %c16], %45 {strides = array<i32>} : memref<64x32xf32, #tpu.memory_space<vmem>>, vector<8x16xf32>,
    %c8 = arith.constant 8 : index
    %c0_29 = arith.constant 0 : index
    %47 = vector.load %arg10[%c8, %c0_29] : memref<64x96xf32, #tpu.memory_space<vmem>>, vector<8x96xf32>
    %48 = arith.truncf %42 : vector<8x32xf32> to vector<8x32xbf16>
    %cst_30 = arith.constant dense<0.000000e+00> : vector<8x96xf32>
    %49 = tpu.matmul %48, %15, %cst_30 {dimension_numbers = #tpu.dot_dimension_numbers<[1], [0], [0], [1], [0, 0, 1, 1], [], []>} : vector<8x32xbf16>, vector<32x96xbf16>, vector<8x96xf32> -> vector<8x96xf32>
    %50 = vector.extract_strided_slice %47 {offsets = [0, 0], sizes = [8, 64], strides = [1, 1]} : vector<8x96xf32> to vector<8x64xf32>
    %51 = vector.extract_strided_slice %49 {offsets = [0, 0], sizes = [8, 64], strides = [1, 1]} : vector<8x96xf32> to vector<8x64xf32>
    %52 = arith.addf %50, %51 : vector<8x64xf32>
    %53 = arith.negf %52 : vector<8x64xf32>
    %54 = math.exp %53 : vector<8x64xf32>
    %cst_31 = arith.constant 1.000000e+00 : f32
    %55 = vector.broadcast %cst_31 : f32 to vector<8x64xf32>
    %56 = arith.addf %55, %54 : vector<8x64xf32>
    %57 = arith.divf %55, %56 : vector<8x64xf32>
    %58 = vector.extract_strided_slice %57 {offsets = [0, 0], sizes = [8, 32], strides = [1, 1]} : vector<8x64xf32> to vector<8x32xf32>
    %59 = vector.extract_strided_slice %57 {offsets = [0, 32], sizes = [8, 32], strides = [1, 1]} : vector<8x64xf32> to vector<8x32xf32>
    %60 = vector.extract_strided_slice %47 {offsets = [0, 64], sizes = [8, 32], strides = [1, 1]} : vector<8x96xf32> to vector<8x32xf32>
    %61 = vector.extract_strided_slice %49 {offsets = [0, 64], sizes = [8, 32], strides = [1, 1]} : vector<8x96xf32> to vector<8x32xf32>
    %62 = arith.addf %61, %17 : vector<8x32xf32>
    %63 = arith.mulf %58, %62 : vector<8x32xf32>
    %64 = arith.addf %60, %63 : vector<8x32xf32>
    %65 = math.tanh %64 : vector<8x32xf32>
    %cst_32 = arith.constant 1.000000e+00 : f32
    %66 = vector.broadcast %cst_32 : f32 to vector<8x32xf32>
    %67 = arith.subf %66, %59 : vector<8x32xf32>
    %68 = arith.mulf %67, %65 : vector<8x32xf32>
    %69 = arith.mulf %59, %42 : vector<8x32xf32>
    %70 = arith.addf %68, %69 : vector<8x32xf32>
    %71 = vector.extract_strided_slice %70 {offsets = [0, 0], sizes = [8, 16], strides = [1, 1]} : vector<8x32xf32> to vector<8x16xf32>
    %c8_33 = arith.constant 8 : index
    %c0_34 = arith.constant 0 : index
    %72 = vector.load %arg11[%c8_33, %c0_34] : memref<64x32xf32, #tpu.memory_space<vmem>>, vector<8x16xf32>
    tpu.vector_store %arg11[%c8_33, %c0_34], %71 {strides = array<i32>} : memref<64x32xf32, #tpu.memory_space<vmem>>, vector<8x16xf32>,
    %73 = vector.extract_strided_slice %70 {offsets = [0, 16], sizes = [8, 16], strides = [1, 1]} : vector<8x32xf32> to vector<8x16xf32>
    %c48 = arith.constant 48 : index
    %c16_35 = arith.constant 16 : index
    %74 = vector.load %arg11[%c48, %c16_35] : memref<64x32xf32, #tpu.memory_space<vmem>>, vector<8x16xf32>
    tpu.vector_store %arg11[%c48, %c16_35], %73 {strides = array<i32>} : memref<64x32xf32, #tpu.memory_space<vmem>>, vector<8x16xf32>,
    %c16_36 = arith.constant 16 : index
    %c0_37 = arith.constant 0 : index
    %75 = vector.load %arg10[%c16_36, %c0_37] : memref<64x96xf32, #tpu.memory_space<vmem>>, vector<8x96xf32>
    %76 = arith.truncf %70 : vector<8x32xf32> to vector<8x32xbf16>
    %cst_38 = arith.constant dense<0.000000e+00> : vector<8x96xf32>
    %77 = tpu.matmul %76, %15, %cst_38 {dimension_numbers = #tpu.dot_dimension_numbers<[1], [0], [0], [1], [0, 0, 1, 1], [], []>} : vector<8x32xbf16>, vector<32x96xbf16>, vector<8x96xf32> -> vector<8x96xf32>
    %78 = vector.extract_strided_slice %75 {offsets = [0, 0], sizes = [8, 64], strides = [1, 1]} : vector<8x96xf32> to vector<8x64xf32>
    %79 = vector.extract_strided_slice %77 {offsets = [0, 0], sizes = [8, 64], strides = [1, 1]} : vector<8x96xf32> to vector<8x64xf32>
    %80 = arith.addf %78, %79 : vector<8x64xf32>
    %81 = arith.negf %80 : vector<8x64xf32>
    %82 = math.exp %81 : vector<8x64xf32>
    %cst_39 = arith.constant 1.000000e+00 : f32
    %83 = vector.broadcast %cst_39 : f32 to vector<8x64xf32>
    %84 = arith.addf %83, %82 : vector<8x64xf32>
    %85 = arith.divf %83, %84 : vector<8x64xf32>
    %86 = vector.extract_strided_slice %85 {offsets = [0, 0], sizes = [8, 32], strides = [1, 1]} : vector<8x64xf32> to vector<8x32xf32>
    %87 = vector.extract_strided_slice %85 {offsets = [0, 32], sizes = [8, 32], strides = [1, 1]} : vector<8x64xf32> to vector<8x32xf32>
    %88 = vector.extract_strided_slice %75 {offsets = [0, 64], sizes = [8, 32], strides = [1, 1]} : vector<8x96xf32> to vector<8x32xf32>
    %89 = vector.extract_strided_slice %77 {offsets = [0, 64], sizes = [8, 32], strides = [1, 1]} : vector<8x96xf32> to vector<8x32xf32>
    %90 = arith.addf %89, %17 : vector<8x32xf32>
    %91 = arith.mulf %86, %90 : vector<8x32xf32>
    %92 = arith.addf %88, %91 : vector<8x32xf32>
    %93 = math.tanh %92 : vector<8x32xf32>
    %cst_40 = arith.constant 1.000000e+00 : f32
    %94 = vector.broadcast %cst_40 : f32 to vector<8x32xf32>
    %95 = arith.subf %94, %87 : vector<8x32xf32>
    %96 = arith.mulf %95, %93 : vector<8x32xf32>
    %97 = arith.mulf %87, %70 : vector<8x32xf32>
    %98 = arith.addf %96, %97 : vector<8x32xf32>
    %99 = vector.extract_strided_slice %98 {offsets = [0, 0], sizes = [8, 16], strides = [1, 1]} : vector<8x32xf32> to vector<8x16xf32>
    %c16_41 = arith.constant 16 : index
    %c0_42 = arith.constant 0 : index
    %100 = vector.load %arg11[%c16_41, %c0_42] : memref<64x32xf32, #tpu.memory_space<vmem>>, vector<8x16xf32>
    tpu.vector_store %arg11[%c16_41, %c0_42], %99 {strides = array<i32>} : memref<64x32xf32, #tpu.memory_space<vmem>>, vector<8x16xf32>,
    %101 = vector.extract_strided_slice %98 {offsets = [0, 16], sizes = [8, 16], strides = [1, 1]} : vector<8x32xf32> to vector<8x16xf32>
    %c40 = arith.constant 40 : index
    %c16_43 = arith.constant 16 : index
    %102 = vector.load %arg11[%c40, %c16_43] : memref<64x32xf32, #tpu.memory_space<vmem>>, vector<8x16xf32>
    tpu.vector_store %arg11[%c40, %c16_43], %101 {strides = array<i32>} : memref<64x32xf32, #tpu.memory_space<vmem>>, vector<8x16xf32>,
    %c24 = arith.constant 24 : index
    %c0_44 = arith.constant 0 : index
    %103 = vector.load %arg10[%c24, %c0_44] : memref<64x96xf32, #tpu.memory_space<vmem>>, vector<8x96xf32>
    %104 = arith.truncf %98 : vector<8x32xf32> to vector<8x32xbf16>
    %cst_45 = arith.constant dense<0.000000e+00> : vector<8x96xf32>
    %105 = tpu.matmul %104, %15, %cst_45 {dimension_numbers = #tpu.dot_dimension_numbers<[1], [0], [0], [1], [0, 0, 1, 1], [], []>} : vector<8x32xbf16>, vector<32x96xbf16>, vector<8x96xf32> -> vector<8x96xf32>
    %106 = vector.extract_strided_slice %103 {offsets = [0, 0], sizes = [8, 64], strides = [1, 1]} : vector<8x96xf32> to vector<8x64xf32>
    %107 = vector.extract_strided_slice %105 {offsets = [0, 0], sizes = [8, 64], strides = [1, 1]} : vector<8x96xf32> to vector<8x64xf32>
    %108 = arith.addf %106, %107 : vector<8x64xf32>
    %109 = arith.negf %108 : vector<8x64xf32>
    %110 = math.exp %109 : vector<8x64xf32>
    %cst_46 = arith.constant 1.000000e+00 : f32
    %111 = vector.broadcast %cst_46 : f32 to vector<8x64xf32>
    %112 = arith.addf %111, %110 : vector<8x64xf32>
    %113 = arith.divf %111, %112 : vector<8x64xf32>
    %114 = vector.extract_strided_slice %113 {offsets = [0, 0], sizes = [8, 32], strides = [1, 1]} : vector<8x64xf32> to vector<8x32xf32>
    %115 = vector.extract_strided_slice %113 {offsets = [0, 32], sizes = [8, 32], strides = [1, 1]} : vector<8x64xf32> to vector<8x32xf32>
    %116 = vector.extract_strided_slice %103 {offsets = [0, 64], sizes = [8, 32], strides = [1, 1]} : vector<8x96xf32> to vector<8x32xf32>
    %117 = vector.extract_strided_slice %105 {offsets = [0, 64], sizes = [8, 32], strides = [1, 1]} : vector<8x96xf32> to vector<8x32xf32>
    %118 = arith.addf %117, %17 : vector<8x32xf32>
    %119 = arith.mulf %114, %118 : vector<8x32xf32>
    %120 = arith.addf %116, %119 : vector<8x32xf32>
    %121 = math.tanh %120 : vector<8x32xf32>
    %cst_47 = arith.constant 1.000000e+00 : f32
    %122 = vector.broadcast %cst_47 : f32 to vector<8x32xf32>
    %123 = arith.subf %122, %115 : vector<8x32xf32>
    %124 = arith.mulf %123, %121 : vector<8x32xf32>
    %125 = arith.mulf %115, %98 : vector<8x32xf32>
    %126 = arith.addf %124, %125 : vector<8x32xf32>
    %127 = vector.extract_strided_slice %126 {offsets = [0, 0], sizes = [8, 16], strides = [1, 1]} : vector<8x32xf32> to vector<8x16xf32>
    %c24_48 = arith.constant 24 : index
    %c0_49 = arith.constant 0 : index
    %128 = vector.load %arg11[%c24_48, %c0_49] : memref<64x32xf32, #tpu.memory_space<vmem>>, vector<8x16xf32>
    tpu.vector_store %arg11[%c24_48, %c0_49], %127 {strides = array<i32>} : memref<64x32xf32, #tpu.memory_space<vmem>>, vector<8x16xf32>,
    %129 = vector.extract_strided_slice %126 {offsets = [0, 16], sizes = [8, 16], strides = [1, 1]} : vector<8x32xf32> to vector<8x16xf32>
    %c32 = arith.constant 32 : index
    %c16_50 = arith.constant 16 : index
    %130 = vector.load %arg11[%c32, %c16_50] : memref<64x32xf32, #tpu.memory_space<vmem>>, vector<8x16xf32>
    tpu.vector_store %arg11[%c32, %c16_50], %129 {strides = array<i32>} : memref<64x32xf32, #tpu.memory_space<vmem>>, vector<8x16xf32>,
    %c32_51 = arith.constant 32 : index
    %c0_52 = arith.constant 0 : index
    %131 = vector.load %arg10[%c32_51, %c0_52] : memref<64x96xf32, #tpu.memory_space<vmem>>, vector<8x96xf32>
    %132 = arith.truncf %126 : vector<8x32xf32> to vector<8x32xbf16>
    %cst_53 = arith.constant dense<0.000000e+00> : vector<8x96xf32>
    %133 = tpu.matmul %132, %15, %cst_53 {dimension_numbers = #tpu.dot_dimension_numbers<[1], [0], [0], [1], [0, 0, 1, 1], [], []>} : vector<8x32xbf16>, vector<32x96xbf16>, vector<8x96xf32> -> vector<8x96xf32>
    %134 = vector.extract_strided_slice %131 {offsets = [0, 0], sizes = [8, 64], strides = [1, 1]} : vector<8x96xf32> to vector<8x64xf32>
    %135 = vector.extract_strided_slice %133 {offsets = [0, 0], sizes = [8, 64], strides = [1, 1]} : vector<8x96xf32> to vector<8x64xf32>
    %136 = arith.addf %134, %135 : vector<8x64xf32>
    %137 = arith.negf %136 : vector<8x64xf32>
    %138 = math.exp %137 : vector<8x64xf32>
    %cst_54 = arith.constant 1.000000e+00 : f32
    %139 = vector.broadcast %cst_54 : f32 to vector<8x64xf32>
    %140 = arith.addf %139, %138 : vector<8x64xf32>
    %141 = arith.divf %139, %140 : vector<8x64xf32>
    %142 = vector.extract_strided_slice %141 {offsets = [0, 0], sizes = [8, 32], strides = [1, 1]} : vector<8x64xf32> to vector<8x32xf32>
    %143 = vector.extract_strided_slice %141 {offsets = [0, 32], sizes = [8, 32], strides = [1, 1]} : vector<8x64xf32> to vector<8x32xf32>
    %144 = vector.extract_strided_slice %131 {offsets = [0, 64], sizes = [8, 32], strides = [1, 1]} : vector<8x96xf32> to vector<8x32xf32>
    %145 = vector.extract_strided_slice %133 {offsets = [0, 64], sizes = [8, 32], strides = [1, 1]} : vector<8x96xf32> to vector<8x32xf32>
    %146 = arith.addf %145, %17 : vector<8x32xf32>
    %147 = arith.mulf %142, %146 : vector<8x32xf32>
    %148 = arith.addf %144, %147 : vector<8x32xf32>
    %149 = math.tanh %148 : vector<8x32xf32>
    %cst_55 = arith.constant 1.000000e+00 : f32
    %150 = vector.broadcast %cst_55 : f32 to vector<8x32xf32>
    %151 = arith.subf %150, %143 : vector<8x32xf32>
    %152 = arith.mulf %151, %149 : vector<8x32xf32>
    %153 = arith.mulf %143, %126 : vector<8x32xf32>
    %154 = arith.addf %152, %153 : vector<8x32xf32>
    %155 = vector.extract_strided_slice %154 {offsets = [0, 0], sizes = [8, 16], strides = [1, 1]} : vector<8x32xf32> to vector<8x16xf32>
    %c32_56 = arith.constant 32 : index
    %c0_57 = arith.constant 0 : index
    %156 = vector.load %arg11[%c32_56, %c0_57] : memref<64x32xf32, #tpu.memory_space<vmem>>, vector<8x16xf32>
    tpu.vector_store %arg11[%c32_56, %c0_57], %155 {strides = array<i32>} : memref<64x32xf32, #tpu.memory_space<vmem>>, vector<8x16xf32>,
    %157 = vector.extract_strided_slice %154 {offsets = [0, 16], sizes = [8, 16], strides = [1, 1]} : vector<8x32xf32> to vector<8x16xf32>
    %c24_58 = arith.constant 24 : index
    %c16_59 = arith.constant 16 : index
    %158 = vector.load %arg11[%c24_58, %c16_59] : memref<64x32xf32, #tpu.memory_space<vmem>>, vector<8x16xf32>
    tpu.vector_store %arg11[%c24_58, %c16_59], %157 {strides = array<i32>} : memref<64x32xf32, #tpu.memory_space<vmem>>, vector<8x16xf32>,
    %c40_60 = arith.constant 40 : index
    %c0_61 = arith.constant 0 : index
    %159 = vector.load %arg10[%c40_60, %c0_61] : memref<64x96xf32, #tpu.memory_space<vmem>>, vector<8x96xf32>
    %160 = arith.truncf %154 : vector<8x32xf32> to vector<8x32xbf16>
    %cst_62 = arith.constant dense<0.000000e+00> : vector<8x96xf32>
    %161 = tpu.matmul %160, %15, %cst_62 {dimension_numbers = #tpu.dot_dimension_numbers<[1], [0], [0], [1], [0, 0, 1, 1], [], []>} : vector<8x32xbf16>, vector<32x96xbf16>, vector<8x96xf32> -> vector<8x96xf32>
    %162 = vector.extract_strided_slice %159 {offsets = [0, 0], sizes = [8, 64], strides = [1, 1]} : vector<8x96xf32> to vector<8x64xf32>
    %163 = vector.extract_strided_slice %161 {offsets = [0, 0], sizes = [8, 64], strides = [1, 1]} : vector<8x96xf32> to vector<8x64xf32>
    %164 = arith.addf %162, %163 : vector<8x64xf32>
    %165 = arith.negf %164 : vector<8x64xf32>
    %166 = math.exp %165 : vector<8x64xf32>
    %cst_63 = arith.constant 1.000000e+00 : f32
    %167 = vector.broadcast %cst_63 : f32 to vector<8x64xf32>
    %168 = arith.addf %167, %166 : vector<8x64xf32>
    %169 = arith.divf %167, %168 : vector<8x64xf32>
    %170 = vector.extract_strided_slice %169 {offsets = [0, 0], sizes = [8, 32], strides = [1, 1]} : vector<8x64xf32> to vector<8x32xf32>
    %171 = vector.extract_strided_slice %169 {offsets = [0, 32], sizes = [8, 32], strides = [1, 1]} : vector<8x64xf32> to vector<8x32xf32>
    %172 = vector.extract_strided_slice %159 {offsets = [0, 64], sizes = [8, 32], strides = [1, 1]} : vector<8x96xf32> to vector<8x32xf32>
    %173 = vector.extract_strided_slice %161 {offsets = [0, 64], sizes = [8, 32], strides = [1, 1]} : vector<8x96xf32> to vector<8x32xf32>
    %174 = arith.addf %173, %17 : vector<8x32xf32>
    %175 = arith.mulf %170, %174 : vector<8x32xf32>
    %176 = arith.addf %172, %175 : vector<8x32xf32>
    %177 = math.tanh %176 : vector<8x32xf32>
    %cst_64 = arith.constant 1.000000e+00 : f32
    %178 = vector.broadcast %cst_64 : f32 to vector<8x32xf32>
    %179 = arith.subf %178, %171 : vector<8x32xf32>
    %180 = arith.mulf %179, %177 : vector<8x32xf32>
    %181 = arith.mulf %171, %154 : vector<8x32xf32>
    %182 = arith.addf %180, %181 : vector<8x32xf32>
    %183 = vector.extract_strided_slice %182 {offsets = [0, 0], sizes = [8, 16], strides = [1, 1]} : vector<8x32xf32> to vector<8x16xf32>
    %c40_65 = arith.constant 40 : index
    %c0_66 = arith.constant 0 : index
    %184 = vector.load %arg11[%c40_65, %c0_66] : memref<64x32xf32, #tpu.memory_space<vmem>>, vector<8x16xf32>
    tpu.vector_store %arg11[%c40_65, %c0_66], %183 {strides = array<i32>} : memref<64x32xf32, #tpu.memory_space<vmem>>, vector<8x16xf32>,
    %185 = vector.extract_strided_slice %182 {offsets = [0, 16], sizes = [8, 16], strides = [1, 1]} : vector<8x32xf32> to vector<8x16xf32>
    %c16_67 = arith.constant 16 : index
    %c16_68 = arith.constant 16 : index
    %186 = vector.load %arg11[%c16_67, %c16_68] : memref<64x32xf32, #tpu.memory_space<vmem>>, vector<8x16xf32>
    tpu.vector_store %arg11[%c16_67, %c16_68], %185 {strides = array<i32>} : memref<64x32xf32, #tpu.memory_space<vmem>>, vector<8x16xf32>,
    %c48_69 = arith.constant 48 : index
    %c0_70 = arith.constant 0 : index
    %187 = vector.load %arg10[%c48_69, %c0_70] : memref<64x96xf32, #tpu.memory_space<vmem>>, vector<8x96xf32>
    %188 = arith.truncf %182 : vector<8x32xf32> to vector<8x32xbf16>
    %cst_71 = arith.constant dense<0.000000e+00> : vector<8x96xf32>
    %189 = tpu.matmul %188, %15, %cst_71 {dimension_numbers = #tpu.dot_dimension_numbers<[1], [0], [0], [1], [0, 0, 1, 1], [], []>} : vector<8x32xbf16>, vector<32x96xbf16>, vector<8x96xf32> -> vector<8x96xf32>
    %190 = vector.extract_strided_slice %187 {offsets = [0, 0], sizes = [8, 64], strides = [1, 1]} : vector<8x96xf32> to vector<8x64xf32>
    %191 = vector.extract_strided_slice %189 {offsets = [0, 0], sizes = [8, 64], strides = [1, 1]} : vector<8x96xf32> to vector<8x64xf32>
    %192 = arith.addf %190, %191 : vector<8x64xf32>
    %193 = arith.negf %192 : vector<8x64xf32>
    %194 = math.exp %193 : vector<8x64xf32>
    %cst_72 = arith.constant 1.000000e+00 : f32
    %195 = vector.broadcast %cst_72 : f32 to vector<8x64xf32>
    %196 = arith.addf %195, %194 : vector<8x64xf32>
    %197 = arith.divf %195, %196 : vector<8x64xf32>
    %198 = vector.extract_strided_slice %197 {offsets = [0, 0], sizes = [8, 32], strides = [1, 1]} : vector<8x64xf32> to vector<8x32xf32>
    %199 = vector.extract_strided_slice %197 {offsets = [0, 32], sizes = [8, 32], strides = [1, 1]} : vector<8x64xf32> to vector<8x32xf32>
    %200 = vector.extract_strided_slice %187 {offsets = [0, 64], sizes = [8, 32], strides = [1, 1]} : vector<8x96xf32> to vector<8x32xf32>
    %201 = vector.extract_strided_slice %189 {offsets = [0, 64], sizes = [8, 32], strides = [1, 1]} : vector<8x96xf32> to vector<8x32xf32>
    %202 = arith.addf %201, %17 : vector<8x32xf32>
    %203 = arith.mulf %198, %202 : vector<8x32xf32>
    %204 = arith.addf %200, %203 : vector<8x32xf32>
    %205 = math.tanh %204 : vector<8x32xf32>
    %cst_73 = arith.constant 1.000000e+00 : f32
    %206 = vector.broadcast %cst_73 : f32 to vector<8x32xf32>
    %207 = arith.subf %206, %199 : vector<8x32xf32>
    %208 = arith.mulf %207, %205 : vector<8x32xf32>
    %209 = arith.mulf %199, %182 : vector<8x32xf32>
    %210 = arith.addf %208, %209 : vector<8x32xf32>
    %211 = vector.extract_strided_slice %210 {offsets = [0, 0], sizes = [8, 16], strides = [1, 1]} : vector<8x32xf32> to vector<8x16xf32>
    %c48_74 = arith.constant 48 : index
    %c0_75 = arith.constant 0 : index
    %212 = vector.load %arg11[%c48_74, %c0_75] : memref<64x32xf32, #tpu.memory_space<vmem>>, vector<8x16xf32>
    tpu.vector_store %arg11[%c48_74, %c0_75], %211 {strides = array<i32>} : memref<64x32xf32, #tpu.memory_space<vmem>>, vector<8x16xf32>,
    %213 = vector.extract_strided_slice %210 {offsets = [0, 16], sizes = [8, 16], strides = [1, 1]} : vector<8x32xf32> to vector<8x16xf32>
    %c8_76 = arith.constant 8 : index
    %c16_77 = arith.constant 16 : index
    %214 = vector.load %arg11[%c8_76, %c16_77] : memref<64x32xf32, #tpu.memory_space<vmem>>, vector<8x16xf32>
    tpu.vector_store %arg11[%c8_76, %c16_77], %213 {strides = array<i32>} : memref<64x32xf32, #tpu.memory_space<vmem>>, vector<8x16xf32>,
    %c56_78 = arith.constant 56 : index
    %c0_79 = arith.constant 0 : index
    %215 = vector.load %arg10[%c56_78, %c0_79] : memref<64x96xf32, #tpu.memory_space<vmem>>, vector<8x96xf32>
    %216 = arith.truncf %210 : vector<8x32xf32> to vector<8x32xbf16>
    %cst_80 = arith.constant dense<0.000000e+00> : vector<8x96xf32>
    %217 = tpu.matmul %216, %15, %cst_80 {dimension_numbers = #tpu.dot_dimension_numbers<[1], [0], [0], [1], [0, 0, 1, 1], [], []>} : vector<8x32xbf16>, vector<32x96xbf16>, vector<8x96xf32> -> vector<8x96xf32>
    %218 = vector.extract_strided_slice %215 {offsets = [0, 0], sizes = [8, 64], strides = [1, 1]} : vector<8x96xf32> to vector<8x64xf32>
    %219 = vector.extract_strided_slice %217 {offsets = [0, 0], sizes = [8, 64], strides = [1, 1]} : vector<8x96xf32> to vector<8x64xf32>
    %220 = arith.addf %218, %219 : vector<8x64xf32>
    %221 = arith.negf %220 : vector<8x64xf32>
    %222 = math.exp %221 : vector<8x64xf32>
    %cst_81 = arith.constant 1.000000e+00 : f32
    %223 = vector.broadcast %cst_81 : f32 to vector<8x64xf32>
    %224 = arith.addf %223, %222 : vector<8x64xf32>
    %225 = arith.divf %223, %224 : vector<8x64xf32>
    %226 = vector.extract_strided_slice %225 {offsets = [0, 0], sizes = [8, 32], strides = [1, 1]} : vector<8x64xf32> to vector<8x32xf32>
    %227 = vector.extract_strided_slice %225 {offsets = [0, 32], sizes = [8, 32], strides = [1, 1]} : vector<8x64xf32> to vector<8x32xf32>
    %228 = vector.extract_strided_slice %215 {offsets = [0, 64], sizes = [8, 32], strides = [1, 1]} : vector<8x96xf32> to vector<8x32xf32>
    %229 = vector.extract_strided_slice %217 {offsets = [0, 64], sizes = [8, 32], strides = [1, 1]} : vector<8x96xf32> to vector<8x32xf32>
    %230 = arith.addf %229, %17 : vector<8x32xf32>
    %231 = arith.mulf %226, %230 : vector<8x32xf32>
    %232 = arith.addf %228, %231 : vector<8x32xf32>
    %233 = math.tanh %232 : vector<8x32xf32>
    %cst_82 = arith.constant 1.000000e+00 : f32
    %234 = vector.broadcast %cst_82 : f32 to vector<8x32xf32>
    %235 = arith.subf %234, %227 : vector<8x32xf32>
    %236 = arith.mulf %235, %233 : vector<8x32xf32>
    %237 = arith.mulf %227, %210 : vector<8x32xf32>
    %238 = arith.addf %236, %237 : vector<8x32xf32>
    %239 = vector.extract_strided_slice %238 {offsets = [0, 0], sizes = [8, 16], strides = [1, 1]} : vector<8x32xf32> to vector<8x16xf32>
    %c56_83 = arith.constant 56 : index
    %c0_84 = arith.constant 0 : index
    %240 = vector.load %arg11[%c56_83, %c0_84] : memref<64x32xf32, #tpu.memory_space<vmem>>, vector<8x16xf32>
    tpu.vector_store %arg11[%c56_83, %c0_84], %239 {strides = array<i32>} : memref<64x32xf32, #tpu.memory_space<vmem>>, vector<8x16xf32>,
    %241 = vector.extract_strided_slice %238 {offsets = [0, 16], sizes = [8, 16], strides = [1, 1]} : vector<8x32xf32> to vector<8x16xf32>
    %c0_85 = arith.constant 0 : index
    %c16_86 = arith.constant 16 : index
    %242 = vector.load %arg11[%c0_85, %c16_86] : memref<64x32xf32, #tpu.memory_space<vmem>>, vector<8x16xf32>
    tpu.vector_store %arg11[%c0_85, %c16_86], %241 {strides = array<i32>} : memref<64x32xf32, #tpu.memory_space<vmem>>, vector<8x16xf32>,
    %c0_87 = arith.constant 0 : index
    %c0_88 = arith.constant 0 : index
    %243 = vector.load %arg11[%c0_87, %c0_88] : memref<64x32xf32, #tpu.memory_space<vmem>>, vector<64x32xf32>
    %244 = vector.extract_strided_slice %243 {offsets = [56, 0], sizes = [8, 32], strides = [1, 1]} : vector<64x32xf32> to vector<8x32xf32>
    %245 = vector.extract_strided_slice %243 {offsets = [48, 0], sizes = [8, 32], strides = [1, 1]} : vector<64x32xf32> to vector<8x32xf32>
    %246 = vector.extract_strided_slice %243 {offsets = [40, 0], sizes = [8, 32], strides = [1, 1]} : vector<64x32xf32> to vector<8x32xf32>
    %247 = vector.extract_strided_slice %243 {offsets = [32, 0], sizes = [8, 32], strides = [1, 1]} : vector<64x32xf32> to vector<8x32xf32>
    %248 = vector.extract_strided_slice %243 {offsets = [24, 0], sizes = [8, 32], strides = [1, 1]} : vector<64x32xf32> to vector<8x32xf32>
    %249 = vector.extract_strided_slice %243 {offsets = [16, 0], sizes = [8, 32], strides = [1, 1]} : vector<64x32xf32> to vector<8x32xf32>
    %250 = vector.extract_strided_slice %243 {offsets = [8, 0], sizes = [8, 32], strides = [1, 1]} : vector<64x32xf32> to vector<8x32xf32>
    %251 = vector.extract_strided_slice %243 {offsets = [0, 0], sizes = [8, 32], strides = [1, 1]} : vector<64x32xf32> to vector<8x32xf32>
    %252 = tpu.concatenate %244, %245, %246, %247, %248, %249, %250, %251 in 0 : vector<8x32xf32>, vector<8x32xf32>, vector<8x32xf32>, vector<8x32xf32>, vector<8x32xf32>, vector<8x32xf32>, vector<8x32xf32>, vector<8x32xf32> -> vector<64x32xf32>
    %253 = arith.truncf %243 : vector<64x32xf32> to vector<64x32xbf16>
    %254 = arith.truncf %252 : vector<64x32xf32> to vector<64x32xbf16>
    %c1 = arith.constant 1 : index
    %c0_89 = arith.constant 0 : index
    %c0_90 = arith.constant 0 : index
    %255 = vector.load %arg2[%c1, %c0_89, %c0_90] : memref<2x32x96xbf16, #tpu.memory_space<vmem>>, vector<1x32x96xbf16>
    %256 = vector.shape_cast %255 : vector<1x32x96xbf16> to vector<32x96xbf16>
    %cst_91 = arith.constant dense<0.000000e+00> : vector<64x96xf32>
    %257 = tpu.matmul %253, %256, %cst_91 {dimension_numbers = #tpu.dot_dimension_numbers<[1], [0], [0], [1], [0, 0, 1, 1], [], []>} : vector<64x32xbf16>, vector<32x96xbf16>, vector<64x96xf32> -> vector<64x96xf32>
    %c1_92 = arith.constant 1 : index
    %c0_93 = arith.constant 0 : index
    %c0_94 = arith.constant 0 : index
    %258 = vector.load %arg3[%c1_92, %c0_93, %c0_94] : memref<2x32x96xbf16, #tpu.memory_space<vmem>>, vector<1x32x96xbf16>
    %259 = vector.shape_cast %258 : vector<1x32x96xbf16> to vector<32x96xbf16>
    %cst_95 = arith.constant dense<0.000000e+00> : vector<64x96xf32>
    %260 = tpu.matmul %254, %259, %cst_95 {dimension_numbers = #tpu.dot_dimension_numbers<[1], [0], [0], [1], [0, 0, 1, 1], [], []>} : vector<64x32xbf16>, vector<32x96xbf16>, vector<64x96xf32> -> vector<64x96xf32>
    %261 = arith.addf %257, %260 : vector<64x96xf32>
    %c1_96 = arith.constant 1 : index
    %c0_97 = arith.constant 0 : index
    %c0_98 = arith.constant 0 : index
    %262 = vector.load %arg5[%c1_96, %c0_97, %c0_98] : memref<2x1x96xf32, #tpu.memory_space<vmem>>, vector<1x1x96xf32>
    %263 = vector.shape_cast %262 : vector<1x1x96xf32> to vector<1x96xf32>
    %264 = vector.broadcast %263 : vector<1x96xf32> to vector<64x96xf32>
    %265 = arith.addf %261, %264 : vector<64x96xf32>
    %c0_99 = arith.constant 0 : index
    %c0_100 = arith.constant 0 : index
    %266 = vector.load %arg10[%c0_99, %c0_100] : memref<64x96xf32, #tpu.memory_space<vmem>>, vector<64x96xf32>
    tpu.vector_store %arg10[%c0_99, %c0_100], %265 {strides = array<i32>} : memref<64x96xf32, #tpu.memory_space<vmem>>, vector<64x96xf32>,
    %c1_101 = arith.constant 1 : index
    %c0_102 = arith.constant 0 : index
    %c0_103 = arith.constant 0 : index
    %267 = vector.load %arg4[%c1_101, %c0_102, %c0_103] : memref<2x32x96xbf16, #tpu.memory_space<vmem>>, vector<1x32x96xbf16>
    %268 = vector.shape_cast %267 : vector<1x32x96xbf16> to vector<32x96xbf16>
    %c1_104 = arith.constant 1 : index
    %c0_105 = arith.constant 0 : index
    %c0_106 = arith.constant 0 : index
    %269 = vector.load %arg6[%c1_104, %c0_105, %c0_106] : memref<2x8x32xf32, #tpu.memory_space<vmem>>, vector<1x8x32xf32>
    %270 = vector.shape_cast %269 : vector<1x8x32xf32> to vector<8x32xf32>
    %cst_107 = arith.constant 0.000000e+00 : f32
    %271 = vector.broadcast %cst_107 : f32 to vector<8x32xf32>
    %c0_108 = arith.constant 0 : index
    %c0_109 = arith.constant 0 : index
    %272 = vector.load %arg10[%c0_108, %c0_109] : memref<64x96xf32, #tpu.memory_space<vmem>>, vector<8x96xf32>
    %273 = arith.truncf %271 : vector<8x32xf32> to vector<8x32xbf16>
    %cst_110 = arith.constant dense<0.000000e+00> : vector<8x96xf32>
    %274 = tpu.matmul %273, %268, %cst_110 {dimension_numbers = #tpu.dot_dimension_numbers<[1], [0], [0], [1], [0, 0, 1, 1], [], []>} : vector<8x32xbf16>, vector<32x96xbf16>, vector<8x96xf32> -> vector<8x96xf32>
    %275 = vector.extract_strided_slice %272 {offsets = [0, 0], sizes = [8, 64], strides = [1, 1]} : vector<8x96xf32> to vector<8x64xf32>
    %276 = vector.extract_strided_slice %274 {offsets = [0, 0], sizes = [8, 64], strides = [1, 1]} : vector<8x96xf32> to vector<8x64xf32>
    %277 = arith.addf %275, %276 : vector<8x64xf32>
    %278 = arith.negf %277 : vector<8x64xf32>
    %279 = math.exp %278 : vector<8x64xf32>
    %cst_111 = arith.constant 1.000000e+00 : f32
    %280 = vector.broadcast %cst_111 : f32 to vector<8x64xf32>
    %281 = arith.addf %280, %279 : vector<8x64xf32>
    %282 = arith.divf %280, %281 : vector<8x64xf32>
    %283 = vector.extract_strided_slice %282 {offsets = [0, 0], sizes = [8, 32], strides = [1, 1]} : vector<8x64xf32> to vector<8x32xf32>
    %284 = vector.extract_strided_slice %282 {offsets = [0, 32], sizes = [8, 32], strides = [1, 1]} : vector<8x64xf32> to vector<8x32xf32>
    %285 = vector.extract_strided_slice %272 {offsets = [0, 64], sizes = [8, 32], strides = [1, 1]} : vector<8x96xf32> to vector<8x32xf32>
    %286 = vector.extract_strided_slice %274 {offsets = [0, 64], sizes = [8, 32], strides = [1, 1]} : vector<8x96xf32> to vector<8x32xf32>
    %287 = arith.addf %286, %270 : vector<8x32xf32>
    %288 = arith.mulf %283, %287 : vector<8x32xf32>
    %289 = arith.addf %285, %288 : vector<8x32xf32>
    %290 = math.tanh %289 : vector<8x32xf32>
    %cst_112 = arith.constant 1.000000e+00 : f32
    %291 = vector.broadcast %cst_112 : f32 to vector<8x32xf32>
    %292 = arith.subf %291, %284 : vector<8x32xf32>
    %293 = arith.mulf %292, %290 : vector<8x32xf32>
    %294 = arith.mulf %284, %271 : vector<8x32xf32>
    %295 = arith.addf %293, %294 : vector<8x32xf32>
    %c8_113 = arith.constant 8 : index
    %c0_114 = arith.constant 0 : index
    %296 = vector.load %arg10[%c8_113, %c0_114] : memref<64x96xf32, #tpu.memory_space<vmem>>, vector<8x96xf32>
    %297 = arith.truncf %295 : vector<8x32xf32> to vector<8x32xbf16>
    %cst_115 = arith.constant dense<0.000000e+00> : vector<8x96xf32>
    %298 = tpu.matmul %297, %268, %cst_115 {dimension_numbers = #tpu.dot_dimension_numbers<[1], [0], [0], [1], [0, 0, 1, 1], [], []>} : vector<8x32xbf16>, vector<32x96xbf16>, vector<8x96xf32> -> vector<8x96xf32>
    %299 = vector.extract_strided_slice %296 {offsets = [0, 0], sizes = [8, 64], strides = [1, 1]} : vector<8x96xf32> to vector<8x64xf32>
    %300 = vector.extract_strided_slice %298 {offsets = [0, 0], sizes = [8, 64], strides = [1, 1]} : vector<8x96xf32> to vector<8x64xf32>
    %301 = arith.addf %299, %300 : vector<8x64xf32>
    %302 = arith.negf %301 : vector<8x64xf32>
    %303 = math.exp %302 : vector<8x64xf32>
    %cst_116 = arith.constant 1.000000e+00 : f32
    %304 = vector.broadcast %cst_116 : f32 to vector<8x64xf32>
    %305 = arith.addf %304, %303 : vector<8x64xf32>
    %306 = arith.divf %304, %305 : vector<8x64xf32>
    %307 = vector.extract_strided_slice %306 {offsets = [0, 0], sizes = [8, 32], strides = [1, 1]} : vector<8x64xf32> to vector<8x32xf32>
    %308 = vector.extract_strided_slice %306 {offsets = [0, 32], sizes = [8, 32], strides = [1, 1]} : vector<8x64xf32> to vector<8x32xf32>
    %309 = vector.extract_strided_slice %296 {offsets = [0, 64], sizes = [8, 32], strides = [1, 1]} : vector<8x96xf32> to vector<8x32xf32>
    %310 = vector.extract_strided_slice %298 {offsets = [0, 64], sizes = [8, 32], strides = [1, 1]} : vector<8x96xf32> to vector<8x32xf32>
    %311 = arith.addf %310, %270 : vector<8x32xf32>
    %312 = arith.mulf %307, %311 : vector<8x32xf32>
    %313 = arith.addf %309, %312 : vector<8x32xf32>
    %314 = math.tanh %313 : vector<8x32xf32>
    %cst_117 = arith.constant 1.000000e+00 : f32
    %315 = vector.broadcast %cst_117 : f32 to vector<8x32xf32>
    %316 = arith.subf %315, %308 : vector<8x32xf32>
    %317 = arith.mulf %316, %314 : vector<8x32xf32>
    %318 = arith.mulf %308, %295 : vector<8x32xf32>
    %319 = arith.addf %317, %318 : vector<8x32xf32>
    %c16_118 = arith.constant 16 : index
    %c0_119 = arith.constant 0 : index
    %320 = vector.load %arg10[%c16_118, %c0_119] : memref<64x96xf32, #tpu.memory_space<vmem>>, vector<8x96xf32>
    %321 = arith.truncf %319 : vector<8x32xf32> to vector<8x32xbf16>
    %cst_120 = arith.constant dense<0.000000e+00> : vector<8x96xf32>
    %322 = tpu.matmul %321, %268, %cst_120 {dimension_numbers = #tpu.dot_dimension_numbers<[1], [0], [0], [1], [0, 0, 1, 1], [], []>} : vector<8x32xbf16>, vector<32x96xbf16>, vector<8x96xf32> -> vector<8x96xf32>
    %323 = vector.extract_strided_slice %320 {offsets = [0, 0], sizes = [8, 64], strides = [1, 1]} : vector<8x96xf32> to vector<8x64xf32>
    %324 = vector.extract_strided_slice %322 {offsets = [0, 0], sizes = [8, 64], strides = [1, 1]} : vector<8x96xf32> to vector<8x64xf32>
    %325 = arith.addf %323, %324 : vector<8x64xf32>
    %326 = arith.negf %325 : vector<8x64xf32>
    %327 = math.exp %326 : vector<8x64xf32>
    %cst_121 = arith.constant 1.000000e+00 : f32
    %328 = vector.broadcast %cst_121 : f32 to vector<8x64xf32>
    %329 = arith.addf %328, %327 : vector<8x64xf32>
    %330 = arith.divf %328, %329 : vector<8x64xf32>
    %331 = vector.extract_strided_slice %330 {offsets = [0, 0], sizes = [8, 32], strides = [1, 1]} : vector<8x64xf32> to vector<8x32xf32>
    %332 = vector.extract_strided_slice %330 {offsets = [0, 32], sizes = [8, 32], strides = [1, 1]} : vector<8x64xf32> to vector<8x32xf32>
    %333 = vector.extract_strided_slice %320 {offsets = [0, 64], sizes = [8, 32], strides = [1, 1]} : vector<8x96xf32> to vector<8x32xf32>
    %334 = vector.extract_strided_slice %322 {offsets = [0, 64], sizes = [8, 32], strides = [1, 1]} : vector<8x96xf32> to vector<8x32xf32>
    %335 = arith.addf %334, %270 : vector<8x32xf32>
    %336 = arith.mulf %331, %335 : vector<8x32xf32>
    %337 = arith.addf %333, %336 : vector<8x32xf32>
    %338 = math.tanh %337 : vector<8x32xf32>
    %cst_122 = arith.constant 1.000000e+00 : f32
    %339 = vector.broadcast %cst_122 : f32 to vector<8x32xf32>
    %340 = arith.subf %339, %332 : vector<8x32xf32>
    %341 = arith.mulf %340, %338 : vector<8x32xf32>
    %342 = arith.mulf %332, %319 : vector<8x32xf32>
    %343 = arith.addf %341, %342 : vector<8x32xf32>
    %c24_123 = arith.constant 24 : index
    %c0_124 = arith.constant 0 : index
    %344 = vector.load %arg10[%c24_123, %c0_124] : memref<64x96xf32, #tpu.memory_space<vmem>>, vector<8x96xf32>
    %345 = arith.truncf %343 : vector<8x32xf32> to vector<8x32xbf16>
    %cst_125 = arith.constant dense<0.000000e+00> : vector<8x96xf32>
    %346 = tpu.matmul %345, %268, %cst_125 {dimension_numbers = #tpu.dot_dimension_numbers<[1], [0], [0], [1], [0, 0, 1, 1], [], []>} : vector<8x32xbf16>, vector<32x96xbf16>, vector<8x96xf32> -> vector<8x96xf32>
    %347 = vector.extract_strided_slice %344 {offsets = [0, 0], sizes = [8, 64], strides = [1, 1]} : vector<8x96xf32> to vector<8x64xf32>
    %348 = vector.extract_strided_slice %346 {offsets = [0, 0], sizes = [8, 64], strides = [1, 1]} : vector<8x96xf32> to vector<8x64xf32>
    %349 = arith.addf %347, %348 : vector<8x64xf32>
    %350 = arith.negf %349 : vector<8x64xf32>
    %351 = math.exp %350 : vector<8x64xf32>
    %cst_126 = arith.constant 1.000000e+00 : f32
    %352 = vector.broadcast %cst_126 : f32 to vector<8x64xf32>
    %353 = arith.addf %352, %351 : vector<8x64xf32>
    %354 = arith.divf %352, %353 : vector<8x64xf32>
    %355 = vector.extract_strided_slice %354 {offsets = [0, 0], sizes = [8, 32], strides = [1, 1]} : vector<8x64xf32> to vector<8x32xf32>
    %356 = vector.extract_strided_slice %354 {offsets = [0, 32], sizes = [8, 32], strides = [1, 1]} : vector<8x64xf32> to vector<8x32xf32>
    %357 = vector.extract_strided_slice %344 {offsets = [0, 64], sizes = [8, 32], strides = [1, 1]} : vector<8x96xf32> to vector<8x32xf32>
    %358 = vector.extract_strided_slice %346 {offsets = [0, 64], sizes = [8, 32], strides = [1, 1]} : vector<8x96xf32> to vector<8x32xf32>
    %359 = arith.addf %358, %270 : vector<8x32xf32>
    %360 = arith.mulf %355, %359 : vector<8x32xf32>
    %361 = arith.addf %357, %360 : vector<8x32xf32>
    %362 = math.tanh %361 : vector<8x32xf32>
    %cst_127 = arith.constant 1.000000e+00 : f32
    %363 = vector.broadcast %cst_127 : f32 to vector<8x32xf32>
    %364 = arith.subf %363, %356 : vector<8x32xf32>
    %365 = arith.mulf %364, %362 : vector<8x32xf32>
    %366 = arith.mulf %356, %343 : vector<8x32xf32>
    %367 = arith.addf %365, %366 : vector<8x32xf32>
    %c32_128 = arith.constant 32 : index
    %c0_129 = arith.constant 0 : index
    %368 = vector.load %arg10[%c32_128, %c0_129] : memref<64x96xf32, #tpu.memory_space<vmem>>, vector<8x96xf32>
    %369 = arith.truncf %367 : vector<8x32xf32> to vector<8x32xbf16>
    %cst_130 = arith.constant dense<0.000000e+00> : vector<8x96xf32>
    %370 = tpu.matmul %369, %268, %cst_130 {dimension_numbers = #tpu.dot_dimension_numbers<[1], [0], [0], [1], [0, 0, 1, 1], [], []>} : vector<8x32xbf16>, vector<32x96xbf16>, vector<8x96xf32> -> vector<8x96xf32>
    %371 = vector.extract_strided_slice %368 {offsets = [0, 0], sizes = [8, 64], strides = [1, 1]} : vector<8x96xf32> to vector<8x64xf32>
    %372 = vector.extract_strided_slice %370 {offsets = [0, 0], sizes = [8, 64], strides = [1, 1]} : vector<8x96xf32> to vector<8x64xf32>
    %373 = arith.addf %371, %372 : vector<8x64xf32>
    %374 = arith.negf %373 : vector<8x64xf32>
    %375 = math.exp %374 : vector<8x64xf32>
    %cst_131 = arith.constant 1.000000e+00 : f32
    %376 = vector.broadcast %cst_131 : f32 to vector<8x64xf32>
    %377 = arith.addf %376, %375 : vector<8x64xf32>
    %378 = arith.divf %376, %377 : vector<8x64xf32>
    %379 = vector.extract_strided_slice %378 {offsets = [0, 0], sizes = [8, 32], strides = [1, 1]} : vector<8x64xf32> to vector<8x32xf32>
    %380 = vector.extract_strided_slice %378 {offsets = [0, 32], sizes = [8, 32], strides = [1, 1]} : vector<8x64xf32> to vector<8x32xf32>
    %381 = vector.extract_strided_slice %368 {offsets = [0, 64], sizes = [8, 32], strides = [1, 1]} : vector<8x96xf32> to vector<8x32xf32>
    %382 = vector.extract_strided_slice %370 {offsets = [0, 64], sizes = [8, 32], strides = [1, 1]} : vector<8x96xf32> to vector<8x32xf32>
    %383 = arith.addf %382, %270 : vector<8x32xf32>
    %384 = arith.mulf %379, %383 : vector<8x32xf32>
    %385 = arith.addf %381, %384 : vector<8x32xf32>
    %386 = math.tanh %385 : vector<8x32xf32>
    %cst_132 = arith.constant 1.000000e+00 : f32
    %387 = vector.broadcast %cst_132 : f32 to vector<8x32xf32>
    %388 = arith.subf %387, %380 : vector<8x32xf32>
    %389 = arith.mulf %388, %386 : vector<8x32xf32>
    %390 = arith.mulf %380, %367 : vector<8x32xf32>
    %391 = arith.addf %389, %390 : vector<8x32xf32>
    %c40_133 = arith.constant 40 : index
    %c0_134 = arith.constant 0 : index
    %392 = vector.load %arg10[%c40_133, %c0_134] : memref<64x96xf32, #tpu.memory_space<vmem>>, vector<8x96xf32>
    %393 = arith.truncf %391 : vector<8x32xf32> to vector<8x32xbf16>
    %cst_135 = arith.constant dense<0.000000e+00> : vector<8x96xf32>
    %394 = tpu.matmul %393, %268, %cst_135 {dimension_numbers = #tpu.dot_dimension_numbers<[1], [0], [0], [1], [0, 0, 1, 1], [], []>} : vector<8x32xbf16>, vector<32x96xbf16>, vector<8x96xf32> -> vector<8x96xf32>
    %395 = vector.extract_strided_slice %392 {offsets = [0, 0], sizes = [8, 64], strides = [1, 1]} : vector<8x96xf32> to vector<8x64xf32>
    %396 = vector.extract_strided_slice %394 {offsets = [0, 0], sizes = [8, 64], strides = [1, 1]} : vector<8x96xf32> to vector<8x64xf32>
    %397 = arith.addf %395, %396 : vector<8x64xf32>
    %398 = arith.negf %397 : vector<8x64xf32>
    %399 = math.exp %398 : vector<8x64xf32>
    %cst_136 = arith.constant 1.000000e+00 : f32
    %400 = vector.broadcast %cst_136 : f32 to vector<8x64xf32>
    %401 = arith.addf %400, %399 : vector<8x64xf32>
    %402 = arith.divf %400, %401 : vector<8x64xf32>
    %403 = vector.extract_strided_slice %402 {offsets = [0, 0], sizes = [8, 32], strides = [1, 1]} : vector<8x64xf32> to vector<8x32xf32>
    %404 = vector.extract_strided_slice %402 {offsets = [0, 32], sizes = [8, 32], strides = [1, 1]} : vector<8x64xf32> to vector<8x32xf32>
    %405 = vector.extract_strided_slice %392 {offsets = [0, 64], sizes = [8, 32], strides = [1, 1]} : vector<8x96xf32> to vector<8x32xf32>
    %406 = vector.extract_strided_slice %394 {offsets = [0, 64], sizes = [8, 32], strides = [1, 1]} : vector<8x96xf32> to vector<8x32xf32>
    %407 = arith.addf %406, %270 : vector<8x32xf32>
    %408 = arith.mulf %403, %407 : vector<8x32xf32>
    %409 = arith.addf %405, %408 : vector<8x32xf32>
    %410 = math.tanh %409 : vector<8x32xf32>
    %cst_137 = arith.constant 1.000000e+00 : f32
    %411 = vector.broadcast %cst_137 : f32 to vector<8x32xf32>
    %412 = arith.subf %411, %404 : vector<8x32xf32>
    %413 = arith.mulf %412, %410 : vector<8x32xf32>
    %414 = arith.mulf %404, %391 : vector<8x32xf32>
    %415 = arith.addf %413, %414 : vector<8x32xf32>
    %c48_138 = arith.constant 48 : index
    %c0_139 = arith.constant 0 : index
    %416 = vector.load %arg10[%c48_138, %c0_139] : memref<64x96xf32, #tpu.memory_space<vmem>>, vector<8x96xf32>
    %417 = arith.truncf %415 : vector<8x32xf32> to vector<8x32xbf16>
    %cst_140 = arith.constant dense<0.000000e+00> : vector<8x96xf32>
    %418 = tpu.matmul %417, %268, %cst_140 {dimension_numbers = #tpu.dot_dimension_numbers<[1], [0], [0], [1], [0, 0, 1, 1], [], []>} : vector<8x32xbf16>, vector<32x96xbf16>, vector<8x96xf32> -> vector<8x96xf32>
    %419 = vector.extract_strided_slice %416 {offsets = [0, 0], sizes = [8, 64], strides = [1, 1]} : vector<8x96xf32> to vector<8x64xf32>
    %420 = vector.extract_strided_slice %418 {offsets = [0, 0], sizes = [8, 64], strides = [1, 1]} : vector<8x96xf32> to vector<8x64xf32>
    %421 = arith.addf %419, %420 : vector<8x64xf32>
    %422 = arith.negf %421 : vector<8x64xf32>
    %423 = math.exp %422 : vector<8x64xf32>
    %cst_141 = arith.constant 1.000000e+00 : f32
    %424 = vector.broadcast %cst_141 : f32 to vector<8x64xf32>
    %425 = arith.addf %424, %423 : vector<8x64xf32>
    %426 = arith.divf %424, %425 : vector<8x64xf32>
    %427 = vector.extract_strided_slice %426 {offsets = [0, 0], sizes = [8, 32], strides = [1, 1]} : vector<8x64xf32> to vector<8x32xf32>
    %428 = vector.extract_strided_slice %426 {offsets = [0, 32], sizes = [8, 32], strides = [1, 1]} : vector<8x64xf32> to vector<8x32xf32>
    %429 = vector.extract_strided_slice %416 {offsets = [0, 64], sizes = [8, 32], strides = [1, 1]} : vector<8x96xf32> to vector<8x32xf32>
    %430 = vector.extract_strided_slice %418 {offsets = [0, 64], sizes = [8, 32], strides = [1, 1]} : vector<8x96xf32> to vector<8x32xf32>
    %431 = arith.addf %430, %270 : vector<8x32xf32>
    %432 = arith.mulf %427, %431 : vector<8x32xf32>
    %433 = arith.addf %429, %432 : vector<8x32xf32>
    %434 = math.tanh %433 : vector<8x32xf32>
    %cst_142 = arith.constant 1.000000e+00 : f32
    %435 = vector.broadcast %cst_142 : f32 to vector<8x32xf32>
    %436 = arith.subf %435, %428 : vector<8x32xf32>
    %437 = arith.mulf %436, %434 : vector<8x32xf32>
    %438 = arith.mulf %428, %415 : vector<8x32xf32>
    %439 = arith.addf %437, %438 : vector<8x32xf32>
    %c56_143 = arith.constant 56 : index
    %c0_144 = arith.constant 0 : index
    %440 = vector.load %arg10[%c56_143, %c0_144] : memref<64x96xf32, #tpu.memory_space<vmem>>, vector<8x96xf32>
    %441 = arith.truncf %439 : vector<8x32xf32> to vector<8x32xbf16>
    %cst_145 = arith.constant dense<0.000000e+00> : vector<8x96xf32>
    %442 = tpu.matmul %441, %268, %cst_145 {dimension_numbers = #tpu.dot_dimension_numbers<[1], [0], [0], [1], [0, 0, 1, 1], [], []>} : vector<8x32xbf16>, vector<32x96xbf16>, vector<8x96xf32> -> vector<8x96xf32>
    %443 = vector.extract_strided_slice %440 {offsets = [0, 0], sizes = [8, 64], strides = [1, 1]} : vector<8x96xf32> to vector<8x64xf32>
    %444 = vector.extract_strided_slice %442 {offsets = [0, 0], sizes = [8, 64], strides = [1, 1]} : vector<8x96xf32> to vector<8x64xf32>
    %445 = arith.addf %443, %444 : vector<8x64xf32>
    %446 = arith.negf %445 : vector<8x64xf32>
    %447 = math.exp %446 : vector<8x64xf32>
    %cst_146 = arith.constant 1.000000e+00 : f32
    %448 = vector.broadcast %cst_146 : f32 to vector<8x64xf32>
    %449 = arith.addf %448, %447 : vector<8x64xf32>
    %450 = arith.divf %448, %449 : vector<8x64xf32>
    %451 = vector.extract_strided_slice %450 {offsets = [0, 0], sizes = [8, 32], strides = [1, 1]} : vector<8x64xf32> to vector<8x32xf32>
    %452 = vector.extract_strided_slice %450 {offsets = [0, 32], sizes = [8, 32], strides = [1, 1]} : vector<8x64xf32> to vector<8x32xf32>
    %453 = vector.extract_strided_slice %440 {offsets = [0, 64], sizes = [8, 32], strides = [1, 1]} : vector<8x96xf32> to vector<8x32xf32>
    %454 = vector.extract_strided_slice %442 {offsets = [0, 64], sizes = [8, 32], strides = [1, 1]} : vector<8x96xf32> to vector<8x32xf32>
    %455 = arith.addf %454, %270 : vector<8x32xf32>
    %456 = arith.mulf %451, %455 : vector<8x32xf32>
    %457 = arith.addf %453, %456 : vector<8x32xf32>
    %458 = math.tanh %457 : vector<8x32xf32>
    %cst_147 = arith.constant 1.000000e+00 : f32
    %459 = vector.broadcast %cst_147 : f32 to vector<8x32xf32>
    %460 = arith.subf %459, %452 : vector<8x32xf32>
    %461 = arith.mulf %460, %458 : vector<8x32xf32>
    %462 = arith.mulf %452, %439 : vector<8x32xf32>
    %463 = arith.addf %461, %462 : vector<8x32xf32>
    %c0_148 = arith.constant 0 : index
    %c0_149 = arith.constant 0 : index
    %464 = vector.load %arg7[%c0_148, %c0_149] : memref<32x128xf32, #tpu.memory_space<vmem>>, vector<32x128xf32>
    %cst_150 = arith.constant dense<0.000000e+00> : vector<8x128xf32>
    %465 = tpu.matmul %463, %464, %cst_150 {dimension_numbers = #tpu.dot_dimension_numbers<[1], [0], [0], [1], [0, 0, 1, 1], [], []>} : vector<8x32xf32>, vector<32x128xf32>, vector<8x128xf32> -> vector<8x128xf32>
    %c0_151 = arith.constant 0 : index
    %c0_152 = arith.constant 0 : index
    %466 = vector.load %arg8[%c0_151, %c0_152] : memref<1x128xf32, #tpu.memory_space<vmem>>, vector<1x128xf32>
    %467 = vector.broadcast %466 : vector<1x128xf32> to vector<8x128xf32>
    %468 = arith.addf %465, %467 : vector<8x128xf32>
    %c0_153 = arith.constant 0 : index
    %c0_154 = arith.constant 0 : index
    %469 = vector.load %arg9[%c0_153, %c0_154] : memref<8x128xf32, #tpu.memory_space<vmem>>, vector<8x128xf32>
    tpu.vector_store %arg9[%c0_153, %c0_154], %468 {strides = array<i32>} : memref<8x128xf32, #tpu.memory_space<vmem>>, vector<8x128xf32>,
    return
  }
}

</mosaic_0001>

<llo_original>
// kernel: tpu_custom_call.1
$region0: #{tpu_custom_call.1}
  #allocation0 [shape = 'u32[]', space=smem, size = 0x4, offset = 0x4, fixed_abs, tag = 'smem constant byte address 0x4 - core index']
  #allocation1 [shape = 'u32[144,128]{1,0:T(1,128)}', space=vmem, size = 0x12000, scoped, tag = 'internal scratch']
  #allocation2 [shape = 'f32[64,96]{1,0:T(8,128)}', space=vmem, size = 0x8000, scoped, tag = 'scratch operand']
  #allocation3 [shape = 'f32[64,32]{1,0:T(8,128)}', space=vmem, size = 0x8000, scoped, tag = 'scratch operand']
  %s0 = inlined_call_operand.vmem [shape: bf16[64,32], index: 0, kind: input, shape index: {}]
  %s1 = inlined_call_operand.vmem [shape: bf16[64,32], index: 1, kind: input, shape index: {}]
  %s2 = inlined_call_operand.vmem [shape: bf16[2,32,96], index: 2, kind: input, shape index: {}]
  %s3 = inlined_call_operand.vmem [shape: bf16[2,32,96], index: 3, kind: input, shape index: {}]
  %s4 = inlined_call_operand.vmem [shape: bf16[2,32,96], index: 4, kind: input, shape index: {}]
  %s5 = inlined_call_operand.vmem [shape: f32[2,1,96], index: 5, kind: input, shape index: {}]
  %s6 = inlined_call_operand.vmem [shape: f32[2,8,32], index: 6, kind: input, shape index: {}]
  %s7 = inlined_call_operand.hbm [shape: f32[32,128], index: 7, kind: input, shape index: {}]
  %s8 = inlined_call_operand.vmem [shape: f32[1,128], index: 8, kind: input, shape index: {}]
  %s9 = inlined_call_operand.hbm [shape: f32[8,128], index: 9, kind: output, shape index: {}]
  %s10 = sld [smem:[#allocation0]]
  $region50: #{tpu_custom_call.1} parent=0
    _
  %s12 = ssub.s32 1, %s10
  %s13 = scalar_select 0, %s12, %s10
  $region1: #{tpu_custom_call.1} parent=0
    #allocation4 [shape = 'u8[16384]{0}', space=vmem, size = 0x4000, scoped, tag = 'input window, operand 7, single buffered']
    #allocation5 [shape = 's32[1]{0}', space=sflag, size = 0x4, scoped, tag = 'scoped memory for tpu_custom_call.1']
    #allocation6 [shape = 's32[1]{0}', space=sflag, size = 0x4, scoped, tag = 'scoped memory for tpu_custom_call.1']
    #allocation7 [shape = 'u8[4096]{0}', space=vmem, size = 0x1000, scoped, tag = 'output window, operand 0, single buffered']
    %14 = vsyncpa [#allocation5], 0
    %15 = vsyncpa [#allocation6], 0
    // Predicated region
    $region2: #{tpu_custom_call.1} parent=1 // pred_check
      _
    $region3: #{tpu_custom_call.1} parent=1 // pred_check_branch
      %17 = sbr.rel (0) target = $region5
    $region4: #{tpu_custom_call.1} parent=1 // pred_region
      _
    $region5: #{tpu_custom_call.1} parent=1 // pred_fallthru
      _
    // Predicated region
    $region6: #{tpu_custom_call.1} parent=1 // pred_check
      _
    $region7: #{tpu_custom_call.1} parent=1 // pred_check_branch
      %19 = sbr.rel (0) target = $region9
    $region8: #{tpu_custom_call.1} parent=1 // pred_region
      _
    $region9: #{tpu_custom_call.1} parent=1 // pred_fallthru
      _
    // Predicated region
    $region10: #{tpu_custom_call.1} parent=1 // pred_check
      _
    $region11: #{tpu_custom_call.1} parent=1 // pred_check_branch
      %21 = sbr.rel (0) target = $region13
    $region12: #{tpu_custom_call.1} parent=1 // pred_region
      _
    $region13: #{tpu_custom_call.1} parent=1 // pred_fallthru
      _
    // Predicated region
    $region14: #{tpu_custom_call.1} parent=1 // pred_check
      _
    $region15: #{tpu_custom_call.1} parent=1 // pred_check_branch
      %23 = sbr.rel (0) target = $region17
    $region16: #{tpu_custom_call.1} parent=1 // pred_region
      _
    $region17: #{tpu_custom_call.1} parent=1 // pred_fallthru
      _
    // Predicated region
    $region18: #{tpu_custom_call.1} parent=1 // pred_check
      _
    $region19: #{tpu_custom_call.1} parent=1 // pred_check_branch
      %25 = sbr.rel (0) target = $region21
    $region20: #{tpu_custom_call.1} parent=1 // pred_region
      _
    $region21: #{tpu_custom_call.1} parent=1 // pred_fallthru
      _
    // Predicated region
    $region22: #{tpu_custom_call.1} parent=1 // pred_check
      _
    $region23: #{tpu_custom_call.1} parent=1 // pred_check_branch
      %27 = sbr.rel (0) target = $region25
    $region24: #{tpu_custom_call.1} parent=1 // pred_region
      _
    $region25: #{tpu_custom_call.1} parent=1 // pred_fallthru
      _
    // Predicated region
    $region26: #{tpu_custom_call.1} parent=1 // pred_check
      _
    $region27: #{tpu_custom_call.1} parent=1 // pred_check_branch
      %29 = sbr.rel (0) target = $region29
    $region28: #{tpu_custom_call.1} parent=1 // pred_region
      _
    $region29: #{tpu_custom_call.1} parent=1 // pred_fallthru
      _
    // Predicated region
    $region30: #{tpu_custom_call.1} parent=1 // pred_check
      _
    $region31: #{tpu_custom_call.1} parent=1 // pred_check_branch
      %31 = sbr.rel (0) target = $region33
    $region32: #{tpu_custom_call.1} parent=1 // pred_region
      %s33 = ssub.s32 512, 512
      %34 = vsyncadd [#allocation5], %s33
      %s35 = sshll.u32 [#allocation4], 4
      %s36 = int_to_ptr.vmem [resolvable:$true] %s35
      %41 = dma.hbm_to_vmem [thread:$0]  %s7, 512, %s36, [#allocation5], 128, 128, 8
    $region33: #{tpu_custom_call.1} parent=1 // pred_fallthru
      _
    // Predicated region
    $region34: #{tpu_custom_call.1} parent=1 // pred_check
      _
    $region35: #{tpu_custom_call.1} parent=1 // pred_check_branch
      %43 = sbr.rel (0) target = $region37
    $region36: #{tpu_custom_call.1} parent=1 // pred_region
      _
    $region37: #{tpu_custom_call.1} parent=1 // pred_fallthru
      _
    // Predicated region
    $region38: #{tpu_custom_call.1} parent=1 // pred_check
      _
    $region39: #{tpu_custom_call.1} parent=1 // pred_check_branch
      %45 = sbr.rel (0) target = $region41
    $region40: #{tpu_custom_call.1} parent=1 // pred_region
      %46 = dma.done [#allocation5], 512
    $region41: #{tpu_custom_call.1} parent=1 // pred_fallthru
      _
    %v48 = vld [vmem:[%s0] sm:$0xf]
    %v49 = vld [vmem:[%s0 + $0x4] sm:$0xf]
    %v50 = vld [vmem:[%s0 + $0x8] sm:$0xf]
    %v51 = vld [vmem:[%s0 + $0xc] sm:$0xf]
    %v52 = vld [vmem:[%s0 + $0x10] sm:$0xf]
    %v53 = vld [vmem:[%s0 + $0x14] sm:$0xf]
    %v54 = vld [vmem:[%s0 + $0x18] sm:$0xf]
    %v55 = vld [vmem:[%s0 + $0x1c] sm:$0xf]
    %v56 = vld [vmem:[%s1] sm:$0xf]
    %v57 = vld [vmem:[%s1 + $0x4] sm:$0xf]
    %v58 = vld [vmem:[%s1 + $0x8] sm:$0xf]
    %v59 = vld [vmem:[%s1 + $0xc] sm:$0xf]
    %v60 = vld [vmem:[%s1 + $0x10] sm:$0xf]
    %v61 = vld [vmem:[%s1 + $0x14] sm:$0xf]
    %v62 = vld [vmem:[%s1 + $0x18] sm:$0xf]
    %v63 = vld [vmem:[%s1 + $0x1c] sm:$0xf]
    %v64 = vld [vmem:[%s2] sm:$0xf]
    %v65 = vld [vmem:[%s2 + $0x4] sm:$0xf]
    %v66 = vld [vmem:[%s2 + $0x8] sm:$0xf]
    %v67 = vld [vmem:[%s2 + $0xc] sm:$0xf]
    %v68 = vld [vmem:[%s3] sm:$0xf]
    %v69 = vld [vmem:[%s3 + $0x4] sm:$0xf]
    %v70 = vld [vmem:[%s3 + $0x8] sm:$0xf]
    %v71 = vld [vmem:[%s3 + $0xc] sm:$0xf]
    %v80 = vunpack.c.l.b16 %v56
    %v81 = vunpack.c.l.b16 %v57
    %v82 = vunpack.c.l.b16 %v58
    %v83 = vunpack.c.l.b16 %v59
    %v84 = vunpack.c.l.b16 %v60
    %v85 = vunpack.c.l.b16 %v61
    %v86 = vunpack.c.l.b16 %v62
    %v87 = vunpack.c.l.b16 %v63
    %v88 = vpack.c.b16 %v81, %v80
    %v89 = vpack.c.b16 %v83, %v82
    %v90 = vpack.c.b16 %v85, %v84
    %v91 = vpack.c.b16 %v87, %v86
    %v96 = vunpack.c.l.b16 %v68
    %v97 = vunpack.c.l.b16 %v69
    %v98 = vunpack.c.l.b16 %v70
    %v99 = vunpack.c.l.b16 %v71
    %v100 = vpack.c.b16 %v97, %v96
    %v101 = vpack.c.b16 %v99, %v98
    %vm104 = vcmask 261120
    %v106 = vsel %vm104, %v88, 0
    %v109 = vsel %vm104, %v89, 0
    %v112 = vsel %vm104, %v90, 0
    %v115 = vsel %vm104, %v91, 0
    %117 = vmatprep.subr.bf16.mxu0 0
    %118 = vmatpush1.bf16.msra.mxu0 %v100
    %119 = vmatprep.subr.bf16.mxu0 0
    %120 = vmatpush1.bf16.msra.mxu0 %v101
    %121 = vmatprep.subr.bf16.mxu0 0
    %122 = vmatpush1.bf16.msra.mxu0 0
    %123 = vmatprep.subr.bf16.mxu0 0
    %124 = vmatpush1.bf16.msra.mxu0 0
    %125 = vmatprep.subr.bf16.mxu0 0
    %126 = vmatpush1.bf16.msra.mxu0 0
    %127 = vmatprep.subr.bf16.mxu0 0
    %128 = vmatpush1.bf16.msra.mxu0 0
    %129 = vmatprep.subr.bf16.mxu0 0
    %130 = vmatpush1.bf16.msra.mxu0 0
    %131 = vmatprep.subr.bf16.mxu0 0
    %132 = vmatpush1.bf16.msra.mxu0 0
    %133 = vmatprep.subr.bf16.mxu0 0
    %134 = vmatpush1.bf16.msra.mxu0 0
    %135 = vmatprep.subr.bf16.mxu0 0
    %136 = vmatpush1.bf16.msra.mxu0 0
    %137 = vmatprep.subr.bf16.mxu0 0
    %138 = vmatpush1.bf16.msra.mxu0 0
    %139 = vmatprep.subr.bf16.mxu0 0
    %140 = vmatpush1.bf16.msra.mxu0 0
    %141 = vmatprep.subr.bf16.mxu0 0
    %142 = vmatpush1.bf16.msra.mxu0 0
    %143 = vmatprep.subr.bf16.mxu0 0
    %144 = vmatpush1.bf16.msra.mxu0 0
    %145 = vmatprep.subr.bf16.mxu0 0
    %146 = vmatpush1.bf16.msra.mxu0 0
    %147 = vmatprep.subr.bf16.mxu0 0
    %148 = vmatpush1.bf16.msra.mxu0 0
    %149 = vmatprep.mubr.bf16.mxu0 0
    %150 = vmatmul.mubr.bf16.gmra.mrb[0].mxu0 %v106
    %v151 = vpop.f32.mrb[0].mxu0
    %v152 = vadd.f32 0.0, %v151
    %v153 = vpop.f32.mrb[0].mxu0
    %v154 = vpop.f32.mrb[0].mxu0
    %v155 = vadd.f32 0.0, %v154
    %v156 = vpop.f32.mrb[0].mxu0
    %157 = vmatprep.mubr.bf16.mxu0 0
    %158 = vmatmul.mubr.bf16.gmra.mrb[0].mxu0 %v109
    %v159 = vpop.f32.mrb[0].mxu0
    %v160 = vadd.f32 0.0, %v159
    %v161 = vpop.f32.mrb[0].mxu0
    %v162 = vpop.f32.mrb[0].mxu0
    %v163 = vadd.f32 0.0, %v162
    %v164 = vpop.f32.mrb[0].mxu0
    %165 = vmatprep.mubr.bf16.mxu0 0
    %166 = vmatmul.mubr.bf16.gmra.mrb[0].mxu0 %v112
    %v167 = vpop.f32.mrb[0].mxu0
    %v168 = vadd.f32 0.0, %v167
    %v169 = vpop.f32.mrb[0].mxu0
    %v170 = vpop.f32.mrb[0].mxu0
    %v171 = vadd.f32 0.0, %v170
    %v172 = vpop.f32.mrb[0].mxu0
    %173 = vmatprep.mubr.bf16.mxu0 0
    %174 = vmatmul.mubr.bf16.gmra.mrb[0].mxu0 %v115
    %v175 = vpop.f32.mrb[0].mxu0
    %v176 = vadd.f32 0.0, %v175
    %v177 = vpop.f32.mrb[0].mxu0
    %v178 = vpop.f32.mrb[0].mxu0
    %v179 = vadd.f32 0.0, %v178
    %v180 = vpop.f32.mrb[0].mxu0
    %181 = vdwg.mxu0
    %v190 = vunpack.c.l.b16 %v48
    %v191 = vunpack.c.l.b16 %v49
    %v192 = vunpack.c.l.b16 %v50
    %v193 = vunpack.c.l.b16 %v51
    %v194 = vunpack.c.l.b16 %v52
    %v195 = vunpack.c.l.b16 %v53
    %v196 = vunpack.c.l.b16 %v54
    %v197 = vunpack.c.l.b16 %v55
    %v198 = vpack.c.b16 %v191, %v190
    %v199 = vpack.c.b16 %v193, %v192
    %v200 = vpack.c.b16 %v195, %v194
    %v201 = vpack.c.b16 %v197, %v196
    %v206 = vunpack.c.l.b16 %v64
    %v207 = vunpack.c.l.b16 %v65
    %v208 = vunpack.c.l.b16 %v66
    %v209 = vunpack.c.l.b16 %v67
    %v210 = vpack.c.b16 %v207, %v206
    %v211 = vpack.c.b16 %v209, %v208
    %v215 = vsel %vm104, %v198, 0
    %v218 = vsel %vm104, %v199, 0
    %v221 = vsel %vm104, %v200, 0
    %v224 = vsel %vm104, %v201, 0
    %226 = vmatprep.subr.bf16.mxu0 0
    %227 = vmatpush1.bf16.msra.mxu0 %v210
    %228 = vmatprep.subr.bf16.mxu0 0
    %229 = vmatpush1.bf16.msra.mxu0 %v211
    %230 = vmatprep.subr.bf16.mxu0 0
    %231 = vmatpush1.bf16.msra.mxu0 0
    %232 = vmatprep.subr.bf16.mxu0 0
    %233 = vmatpush1.bf16.msra.mxu0 0
    %234 = vmatprep.subr.bf16.mxu0 0
    %235 = vmatpush1.bf16.msra.mxu0 0
    %236 = vmatprep.subr.bf16.mxu0 0
    %237 = vmatpush1.bf16.msra.mxu0 0
    %238 = vmatprep.subr.bf16.mxu0 0
    %239 = vmatpush1.bf16.msra.mxu0 0
    %240 = vmatprep.subr.bf16.mxu0 0
    %241 = vmatpush1.bf16.msra.mxu0 0
    %242 = vmatprep.subr.bf16.mxu0 0
    %243 = vmatpush1.bf16.msra.mxu0 0
    %244 = vmatprep.subr.bf16.mxu0 0
    %245 = vmatpush1.bf16.msra.mxu0 0
    %246 = vmatprep.subr.bf16.mxu0 0
    %247 = vmatpush1.bf16.msra.mxu0 0
    %248 = vmatprep.subr.bf16.mxu0 0
    %249 = vmatpush1.bf16.msra.mxu0 0
    %250 = vmatprep.subr.bf16.mxu0 0
    %251 = vmatpush1.bf16.msra.mxu0 0
    %252 = vmatprep.subr.bf16.mxu0 0
    %253 = vmatpush1.bf16.msra.mxu0 0
    %254 = vmatprep.subr.bf16.mxu0 0
    %255 = vmatpush1.bf16.msra.mxu0 0
    %256 = vmatprep.subr.bf16.mxu0 0
    %257 = vmatpush1.bf16.msra.mxu0 0
    %258 = vmatprep.mubr.bf16.mxu0 0
    %259 = vmatmul.mubr.bf16.gmra.mrb[0].mxu0 %v215
    %v260 = vpop.f32.mrb[0].mxu0
    %v261 = vadd.f32 %v152, %v260
    %v262 = vpop.f32.mrb[0].mxu0
    %v263 = vpop.f32.mrb[0].mxu0
    %v264 = vadd.f32 %v155, %v263
    %v265 = vpop.f32.mrb[0].mxu0
    %266 = vmatprep.mubr.bf16.mxu0 0
    %267 = vmatmul.mubr.bf16.gmra.mrb[0].mxu0 %v218
    %v268 = vpop.f32.mrb[0].mxu0
    %v269 = vadd.f32 %v160, %v268
    %v270 = vpop.f32.mrb[0].mxu0
    %v271 = vpop.f32.mrb[0].mxu0
    %v272 = vadd.f32 %v163, %v271
    %v273 = vpop.f32.mrb[0].mxu0
    %274 = vmatprep.mubr.bf16.mxu0 0
    %275 = vmatmul.mubr.bf16.gmra.mrb[0].mxu0 %v221
    %v276 = vpop.f32.mrb[0].mxu0
    %v277 = vadd.f32 %v168, %v276
    %v278 = vpop.f32.mrb[0].mxu0
    %v279 = vpop.f32.mrb[0].mxu0
    %v280 = vadd.f32 %v171, %v279
    %v281 = vpop.f32.mrb[0].mxu0
    %282 = vmatprep.mubr.bf16.mxu0 0
    %283 = vmatmul.mubr.bf16.gmra.mrb[0].mxu0 %v224
    %v284 = vpop.f32.mrb[0].mxu0
    %v285 = vadd.f32 %v176, %v284
    %v286 = vpop.f32.mrb[0].mxu0
    %v287 = vpop.f32.mrb[0].mxu0
    %v288 = vadd.f32 %v179, %v287
    %v289 = vpop.f32.mrb[0].mxu0
    %290 = vdwg.mxu0
    %v291 = vld [vmem:[%s5] sm:$0x1]
    %v293 = vlaneseq
    %v294 = vshrl.u32 %v293, 7
    %v295 = vsub.s32 0, %v294
    %v296 = vrot.slane %v291, %v295
    %v298 = vadd.f32 %v261, %v296
    %v299 = vadd.f32 %v264, %v296
    %v300 = vadd.f32 %v269, %v296
    %v301 = vadd.f32 %v272, %v296
    %v302 = vadd.f32 %v277, %v296
    %v303 = vadd.f32 %v280, %v296
    %v304 = vadd.f32 %v285, %v296
    %v305 = vadd.f32 %v288, %v296
    %vm306 = vcmask 785408
    %307 = vst.msk [vmem:[#allocation2] sm:$0xff] %vm306, %v298
    %308 = vst.msk [vmem:[#allocation2 + $0x8] sm:$0xff] %vm306, %v299
    %309 = vst.msk [vmem:[#allocation2 + $0x10] sm:$0xff] %vm306, %v300
    %310 = vst.msk [vmem:[#allocation2 + $0x18] sm:$0xff] %vm306, %v301
    %311 = vst.msk [vmem:[#allocation2 + $0x20] sm:$0xff] %vm306, %v302
    %312 = vst.msk [vmem:[#allocation2 + $0x28] sm:$0xff] %vm306, %v303
    %313 = vst.msk [vmem:[#allocation2 + $0x30] sm:$0xff] %vm306, %v304
    %314 = vst.msk [vmem:[#allocation2 + $0x38] sm:$0xff] %vm306, %v305
    %v315 = vld [vmem:[%s4] sm:$0xf]
    %v316 = vld [vmem:[%s4 + $0x4] sm:$0xf]
    %v317 = vld [vmem:[%s4 + $0x8] sm:$0xf]
    %v318 = vld [vmem:[%s4 + $0xc] sm:$0xf]
    %v319 = vld [vmem:[%s6] sm:$0xff]
    %v320 = vld [vmem:[#allocation2] sm:$0xff]
    %v325 = vunpack.c.l.b16 %v315
    %v326 = vunpack.c.l.b16 %v316
    %v327 = vunpack.c.l.b16 %v317
    %v328 = vunpack.c.l.b16 %v318
    %v329 = vpack.c.b16 %v326, %v325
    %v330 = vpack.c.b16 %v328, %v327
    %v334 = vsel %vm104, 0, 0
    %336 = vmatprep.subr.bf16.mxu0 0
    %337 = vmatpush1.bf16.msra.mxu0 %v329
    %338 = vmatprep.subr.bf16.mxu0 0
    %339 = vmatpush1.bf16.msra.mxu0 %v330
    %340 = vmatprep.subr.bf16.mxu0 0
    %341 = vmatpush1.bf16.msra.mxu0 0
    %342 = vmatprep.subr.bf16.mxu0 0
    %343 = vmatpush1.bf16.msra.mxu0 0
    %344 = vmatprep.subr.bf16.mxu0 0
    %345 = vmatpush1.bf16.msra.mxu0 0
    %346 = vmatprep.subr.bf16.mxu0 0
    %347 = vmatpush1.bf16.msra.mxu0 0
    %348 = vmatprep.subr.bf16.mxu0 0
    %349 = vmatpush1.bf16.msra.mxu0 0
    %350 = vmatprep.subr.bf16.mxu0 0
    %351 = vmatpush1.bf16.msra.mxu0 0
    %352 = vmatprep.subr.bf16.mxu0 0
    %353 = vmatpush1.bf16.msra.mxu0 0
    %354 = vmatprep.subr.bf16.mxu0 0
    %355 = vmatpush1.bf16.msra.mxu0 0
    %356 = vmatprep.subr.bf16.mxu0 0
    %357 = vmatpush1.bf16.msra.mxu0 0
    %358 = vmatprep.subr.bf16.mxu0 0
    %359 = vmatpush1.bf16.msra.mxu0 0
    %360 = vmatprep.subr.bf16.mxu0 0
    %361 = vmatpush1.bf16.msra.mxu0 0
    %362 = vmatprep.subr.bf16.mxu0 0
    %363 = vmatpush1.bf16.msra.mxu0 0
    %364 = vmatprep.subr.bf16.mxu0 0
    %365 = vmatpush1.bf16.msra.mxu0 0
    %366 = vmatprep.subr.bf16.mxu0 0
    %367 = vmatpush1.bf16.msra.mxu0 0
    %368 = vmatprep.mubr.bf16.mxu0 0
    %369 = vmatmul.mubr.bf16.gmra.mrb[0].mxu0 %v334
    %v370 = vpop.f32.mrb[0].mxu0
    %v371 = vadd.f32 0.0, %v370
    %v372 = vpop.f32.mrb[0].mxu0
    %v373 = vpop.f32.mrb[0].mxu0
    %v374 = vpop.f32.mrb[0].mxu0
    %375 = vdwg.mxu0
    %v376 = vadd.f32 %v320, %v371
    %v377 = vxor.u32 %v376, 2147483648
    %v378 = vmul.f32 %v377, 1.442695
    %v379 = vpow.pop %v378
    %v380 = vadd.f32 %v379, 1.0
    %v381 = vrcp.pop %v380
    %v382 = vmul.f32 1.0, %v381
    %384 = vrot.lane.b32.xlu0 %v319, 64
    %v385 = vpop.permute.xlu0 %384
    %v387 = vadd.f32 %v371, %v385
    %389 = vrot.lane.b32.xlu0 %v387, 64
    %v390 = vpop.permute.xlu0 %389
    %v392 = vmul.f32 %v382, %v390
    %394 = vrot.lane.b32.xlu0 %v392, 64
    %v395 = vpop.permute.xlu0 %394
    %v397 = vadd.f32 %v320, %v395
    %v398 = vtanh.pop %v397
    %v399 = vsub.f32 1.0, %v382
    %401 = vrot.lane.b32.xlu0 %v398, 96
    %v402 = vpop.permute.xlu0 %401
    %v404 = vmul.f32 %v399, %v402
    %v405 = vmul.f32 %v382, 0.0
    %v406 = vadd.f32 %v404, %v405
    %408 = vrot.lane.b32.xlu0 %v406, 96
    %v409 = vpop.permute.xlu0 %408
    %vm411 = vcmask 130048
    %412 = vst.msk [vmem:[#allocation3] sm:$0xff] %vm411, %v409
    %vm413 = vcmask 261248
    %414 = vst.msk [vmem:[#allocation3 + $0x38] sm:$0xff] %vm413, %v409
    %v415 = vld [vmem:[#allocation2 + $0x8] sm:$0xff]
    %v416 = vpack.c.bf16 %v406, %v406
    %418 = vrot.lane.b32.xlu0 %v416, 96
    %v419 = vpop.permute.xlu0 %418
    %v421 = vsel %vm104, %v419, 0
    %423 = vmatprep.subr.bf16.mxu0 0
    %424 = vmatpush1.bf16.msra.mxu0 %v329
    %425 = vmatprep.subr.bf16.mxu0 0
    %426 = vmatpush1.bf16.msra.mxu0 %v330
    %427 = vmatprep.subr.bf16.mxu0 0
    %428 = vmatpush1.bf16.msra.mxu0 0
    %429 = vmatprep.subr.bf16.mxu0 0
    %430 = vmatpush1.bf16.msra.mxu0 0
    %431 = vmatprep.subr.bf16.mxu0 0
    %432 = vmatpush1.bf16.msra.mxu0 0
    %433 = vmatprep.subr.bf16.mxu0 0
    %434 = vmatpush1.bf16.msra.mxu0 0
    %435 = vmatprep.subr.bf16.mxu0 0
    %436 = vmatpush1.bf16.msra.mxu0 0
    %437 = vmatprep.subr.bf16.mxu0 0
    %438 = vmatpush1.bf16.msra.mxu0 0
    %439 = vmatprep.subr.bf16.mxu0 0
    %440 = vmatpush1.bf16.msra.mxu0 0
    %441 = vmatprep.subr.bf16.mxu0 0
    %442 = vmatpush1.bf16.msra.mxu0 0
    %443 = vmatprep.subr.bf16.mxu0 0
    %444 = vmatpush1.bf16.msra.mxu0 0
    %445 = vmatprep.subr.bf16.mxu0 0
    %446 = vmatpush1.bf16.msra.mxu0 0
    %447 = vmatprep.subr.bf16.mxu0 0
    %448 = vmatpush1.bf16.msra.mxu0 0
    %449 = vmatprep.subr.bf16.mxu0 0
    %450 = vmatpush1.bf16.msra.mxu0 0
    %451 = vmatprep.subr.bf16.mxu0 0
    %452 = vmatpush1.bf16.msra.mxu0 0
    %453 = vmatprep.subr.bf16.mxu0 0
    %454 = vmatpush1.bf16.msra.mxu0 0
    %455 = vmatprep.mubr.bf16.mxu0 0
    %456 = vmatmul.mubr.bf16.gmra.mrb[0].mxu0 %v421
    %v457 = vpop.f32.mrb[0].mxu0
    %v458 = vadd.f32 0.0, %v457
    %v459 = vpop.f32.mrb[0].mxu0
    %v460 = vpop.f32.mrb[0].mxu0
    %v461 = vpop.f32.mrb[0].mxu0
    %462 = vdwg.mxu0
    %v463 = vadd.f32 %v415, %v458
    %v464 = vxor.u32 %v463, 2147483648
    %v465 = vmul.f32 %v464, 1.442695
    %v466 = vpow.pop %v465
    %v467 = vadd.f32 %v466, 1.0
    %v468 = vrcp.pop %v467
    %v469 = vmul.f32 1.0, %v468
    %v470 = vadd.f32 %v458, %v385
    %472 = vrot.lane.b32.xlu0 %v470, 64
    %v473 = vpop.permute.xlu0 %472
    %v475 = vmul.f32 %v469, %v473
    %477 = vrot.lane.b32.xlu0 %v475, 64
    %v478 = vpop.permute.xlu0 %477
    %v480 = vadd.f32 %v415, %v478
    %v481 = vtanh.pop %v480
    %v482 = vsub.f32 1.0, %v469
    %484 = vrot.lane.b32.xlu0 %v481, 96
    %v485 = vpop.permute.xlu0 %484
    %v487 = vmul.f32 %v482, %v485
    %v488 = vmul.f32 %v469, %v406
    %v489 = vadd.f32 %v487, %v488
    %491 = vrot.lane.b32.xlu0 %v489, 96
    %v492 = vpop.permute.xlu0 %491
    %494 = vst.msk [vmem:[#allocation3 + $0x8] sm:$0xff] %vm411, %v492
    %495 = vst.msk [vmem:[#allocation3 + $0x30] sm:$0xff] %vm413, %v492
    %v496 = vld [vmem:[#allocation2 + $0x10] sm:$0xff]
    %v497 = vpack.c.bf16 %v489, %v489
    %499 = vrot.lane.b32.xlu0 %v497, 96
    %v500 = vpop.permute.xlu0 %499
    %v502 = vsel %vm104, %v500, 0
    %504 = vmatprep.subr.bf16.mxu0 0
    %505 = vmatpush1.bf16.msra.mxu0 %v329
    %506 = vmatprep.subr.bf16.mxu0 0
    %507 = vmatpush1.bf16.msra.mxu0 %v330
    %508 = vmatprep.subr.bf16.mxu0 0
    %509 = vmatpush1.bf16.msra.mxu0 0
    %510 = vmatprep.subr.bf16.mxu0 0
    %511 = vmatpush1.bf16.msra.mxu0 0
    %512 = vmatprep.subr.bf16.mxu0 0
    %513 = vmatpush1.bf16.msra.mxu0 0
    %514 = vmatprep.subr.bf16.mxu0 0
    %515 = vmatpush1.bf16.msra.mxu0 0
    %516 = vmatprep.subr.bf16.mxu0 0
    %517 = vmatpush1.bf16.msra.mxu0 0
    %518 = vmatprep.subr.bf16.mxu0 0
    %519 = vmatpush1.bf16.msra.mxu0 0
    %520 = vmatprep.subr.bf16.mxu0 0
    %521 = vmatpush1.bf16.msra.mxu0 0
    %522 = vmatprep.subr.bf16.mxu0 0
    %523 = vmatpush1.bf16.msra.mxu0 0
    %524 = vmatprep.subr.bf16.mxu0 0
    %525 = vmatpush1.bf16.msra.mxu0 0
    %526 = vmatprep.subr.bf16.mxu0 0
    %527 = vmatpush1.bf16.msra.mxu0 0
    %528 = vmatprep.subr.bf16.mxu0 0
    %529 = vmatpush1.bf16.msra.mxu0 0
    %530 = vmatprep.subr.bf16.mxu0 0
    %531 = vmatpush1.bf16.msra.mxu0 0
    %532 = vmatprep.subr.bf16.mxu0 0
    %533 = vmatpush1.bf16.msra.mxu0 0
    %534 = vmatprep.subr.bf16.mxu0 0
    %535 = vmatpush1.bf16.msra.mxu0 0
    %536 = vmatprep.mubr.bf16.mxu0 0
    %537 = vmatmul.mubr.bf16.gmra.mrb[0].mxu0 %v502
    %v538 = vpop.f32.mrb[0].mxu0
    %v539 = vadd.f32 0.0, %v538
    %v540 = vpop.f32.mrb[0].mxu0
    %v541 = vpop.f32.mrb[0].mxu0
    %v542 = vpop.f32.mrb[0].mxu0
    %543 = vdwg.mxu0
    %v544 = vadd.f32 %v496, %v539
    %v545 = vxor.u32 %v544, 2147483648
    %v546 = vmul.f32 %v545, 1.442695
    %v547 = vpow.pop %v546
    %v548 = vadd.f32 %v547, 1.0
    %v549 = vrcp.pop %v548
    %v550 = vmul.f32 1.0, %v549
    %v551 = vadd.f32 %v539, %v385
    %553 = vrot.lane.b32.xlu0 %v551, 64
    %v554 = vpop.permute.xlu0 %553
    %v556 = vmul.f32 %v550, %v554
    %558 = vrot.lane.b32.xlu0 %v556, 64
    %v559 = vpop.permute.xlu0 %558
    %v561 = vadd.f32 %v496, %v559
    %v562 = vtanh.pop %v561
    %v563 = vsub.f32 1.0, %v550
    %565 = vrot.lane.b32.xlu0 %v562, 96
    %v566 = vpop.permute.xlu0 %565
    %v568 = vmul.f32 %v563, %v566
    %v569 = vmul.f32 %v550, %v489
    %v570 = vadd.f32 %v568, %v569
    %572 = vrot.lane.b32.xlu0 %v570, 96
    %v573 = vpop.permute.xlu0 %572
    %575 = vst.msk [vmem:[#allocation3 + $0x10] sm:$0xff] %vm411, %v573
    %576 = vst.msk [vmem:[#allocation3 + $0x28] sm:$0xff] %vm413, %v573
    %v577 = vld [vmem:[#allocation2 + $0x18] sm:$0xff]
    %v578 = vpack.c.bf16 %v570, %v570
    %580 = vrot.lane.b32.xlu0 %v578, 96
    %v581 = vpop.permute.xlu0 %580
    %v583 = vsel %vm104, %v581, 0
    %585 = vmatprep.subr.bf16.mxu0 0
    %586 = vmatpush1.bf16.msra.mxu0 %v329
    %587 = vmatprep.subr.bf16.mxu0 0
    %588 = vmatpush1.bf16.msra.mxu0 %v330
    %589 = vmatprep.subr.bf16.mxu0 0
    %590 = vmatpush1.bf16.msra.mxu0 0
    %591 = vmatprep.subr.bf16.mxu0 0
    %592 = vmatpush1.bf16.msra.mxu0 0
    %593 = vmatprep.subr.bf16.mxu0 0
    %594 = vmatpush1.bf16.msra.mxu0 0
    %595 = vmatprep.subr.bf16.mxu0 0
    %596 = vmatpush1.bf16.msra.mxu0 0
    %597 = vmatprep.subr.bf16.mxu0 0
    %598 = vmatpush1.bf16.msra.mxu0 0
    %599 = vmatprep.subr.bf16.mxu0 0
    %600 = vmatpush1.bf16.msra.mxu0 0
    %601 = vmatprep.subr.bf16.mxu0 0
    %602 = vmatpush1.bf16.msra.mxu0 0
    %603 = vmatprep.subr.bf16.mxu0 0
    %604 = vmatpush1.bf16.msra.mxu0 0
    %605 = vmatprep.subr.bf16.mxu0 0
    %606 = vmatpush1.bf16.msra.mxu0 0
    %607 = vmatprep.subr.bf16.mxu0 0
    %608 = vmatpush1.bf16.msra.mxu0 0
    %609 = vmatprep.subr.bf16.mxu0 0
    %610 = vmatpush1.bf16.msra.mxu0 0
    %611 = vmatprep.subr.bf16.mxu0 0
    %612 = vmatpush1.bf16.msra.mxu0 0
    %613 = vmatprep.subr.bf16.mxu0 0
    %614 = vmatpush1.bf16.msra.mxu0 0
    %615 = vmatprep.subr.bf16.mxu0 0
    %616 = vmatpush1.bf16.msra.mxu0 0
    %617 = vmatprep.mubr.bf16.mxu0 0
    %618 = vmatmul.mubr.bf16.gmra.mrb[0].mxu0 %v583
    %v619 = vpop.f32.mrb[0].mxu0
    %v620 = vadd.f32 0.0, %v619
    %v621 = vpop.f32.mrb[0].mxu0
    %v622 = vpop.f32.mrb[0].mxu0
    %v623 = vpop.f32.mrb[0].mxu0
    %624 = vdwg.mxu0
    %v625 = vadd.f32 %v577, %v620
    %v626 = vxor.u32 %v625, 2147483648
    %v627 = vmul.f32 %v626, 1.442695
    %v628 = vpow.pop %v627
    %v629 = vadd.f32 %v628, 1.0
    %v630 = vrcp.pop %v629
    %v631 = vmul.f32 1.0, %v630
    %v632 = vadd.f32 %v620, %v385
    %634 = vrot.lane.b32.xlu0 %v632, 64
    %v635 = vpop.permute.xlu0 %634
    %v637 = vmul.f32 %v631, %v635
    %639 = vrot.lane.b32.xlu0 %v637, 64
    %v640 = vpop.permute.xlu0 %639
    %v642 = vadd.f32 %v577, %v640
    %v643 = vtanh.pop %v642
    %v644 = vsub.f32 1.0, %v631
    %646 = vrot.lane.b32.xlu0 %v643, 96
    %v647 = vpop.permute.xlu0 %646
    %v649 = vmul.f32 %v644, %v647
    %v650 = vmul.f32 %v631, %v570
    %v651 = vadd.f32 %v649, %v650
    %653 = vrot.lane.b32.xlu0 %v651, 96
    %v654 = vpop.permute.xlu0 %653
    %656 = vst.msk [vmem:[#allocation3 + $0x18] sm:$0xff] %vm411, %v654
    %657 = vst.msk [vmem:[#allocation3 + $0x20] sm:$0xff] %vm413, %v654
    %v658 = vld [vmem:[#allocation2 + $0x20] sm:$0xff]
    %v659 = vpack.c.bf16 %v651, %v651
    %661 = vrot.lane.b32.xlu0 %v659, 96
    %v662 = vpop.permute.xlu0 %661
    %v664 = vsel %vm104, %v662, 0
    %666 = vmatprep.subr.bf16.mxu0 0
    %667 = vmatpush1.bf16.msra.mxu0 %v329
    %668 = vmatprep.subr.bf16.mxu0 0
    %669 = vmatpush1.bf16.msra.mxu0 %v330
    %670 = vmatprep.subr.bf16.mxu0 0
    %671 = vmatpush1.bf16.msra.mxu0 0
    %672 = vmatprep.subr.bf16.mxu0 0
    %673 = vmatpush1.bf16.msra.mxu0 0
    %674 = vmatprep.subr.bf16.mxu0 0
    %675 = vmatpush1.bf16.msra.mxu0 0
    %676 = vmatprep.subr.bf16.mxu0 0
    %677 = vmatpush1.bf16.msra.mxu0 0
    %678 = vmatprep.subr.bf16.mxu0 0
    %679 = vmatpush1.bf16.msra.mxu0 0
    %680 = vmatprep.subr.bf16.mxu0 0
    %681 = vmatpush1.bf16.msra.mxu0 0
    %682 = vmatprep.subr.bf16.mxu0 0
    %683 = vmatpush1.bf16.msra.mxu0 0
    %684 = vmatprep.subr.bf16.mxu0 0
    %685 = vmatpush1.bf16.msra.mxu0 0
    %686 = vmatprep.subr.bf16.mxu0 0
    %687 = vmatpush1.bf16.msra.mxu0 0
    %688 = vmatprep.subr.bf16.mxu0 0
    %689 = vmatpush1.bf16.msra.mxu0 0
    %690 = vmatprep.subr.bf16.mxu0 0
    %691 = vmatpush1.bf16.msra.mxu0 0
    %692 = vmatprep.subr.bf16.mxu0 0
    %693 = vmatpush1.bf16.msra.mxu0 0
    %694 = vmatprep.subr.bf16.mxu0 0
    %695 = vmatpush1.bf16.msra.mxu0 0
    %696 = vmatprep.subr.bf16.mxu0 0
    %697 = vmatpush1.bf16.msra.mxu0 0
    %698 = vmatprep.mubr.bf16.mxu0 0
    %699 = vmatmul.mubr.bf16.gmra.mrb[0].mxu0 %v664
    %v700 = vpop.f32.mrb[0].mxu0
    %v701 = vadd.f32 0.0, %v700
    %v702 = vpop.f32.mrb[0].mxu0
    %v703 = vpop.f32.mrb[0].mxu0
    %v704 = vpop.f32.mrb[0].mxu0
    %705 = vdwg.mxu0
    %v706 = vadd.f32 %v658, %v701
    %v707 = vxor.u32 %v706, 2147483648
    %v708 = vmul.f32 %v707, 1.442695
    %v709 = vpow.pop %v708
    %v710 = vadd.f32 %v709, 1.0
    %v711 = vrcp.pop %v710
    %v712 = vmul.f32 1.0, %v711
    %v713 = vadd.f32 %v701, %v385
    %715 = vrot.lane.b32.xlu0 %v713, 64
    %v716 = vpop.permute.xlu0 %715
    %v718 = vmul.f32 %v712, %v716
    %720 = vrot.lane.b32.xlu0 %v718, 64
    %v721 = vpop.permute.xlu0 %720
    %v723 = vadd.f32 %v658, %v721
    %v724 = vtanh.pop %v723
    %v725 = vsub.f32 1.0, %v712
    %727 = vrot.lane.b32.xlu0 %v724, 96
    %v728 = vpop.permute.xlu0 %727
    %v730 = vmul.f32 %v725, %v728
    %v731 = vmul.f32 %v712, %v651
    %v732 = vadd.f32 %v730, %v731
    %734 = vrot.lane.b32.xlu0 %v732, 96
    %v735 = vpop.permute.xlu0 %734
    %737 = vst.msk [vmem:[#allocation3 + $0x20] sm:$0xff] %vm411, %v735
    %738 = vst.msk [vmem:[#allocation3 + $0x18] sm:$0xff] %vm413, %v735
    %v739 = vld [vmem:[#allocation2 + $0x28] sm:$0xff]
    %v740 = vpack.c.bf16 %v732, %v732
    %742 = vrot.lane.b32.xlu0 %v740, 96
    %v743 = vpop.permute.xlu0 %742
    %v745 = vsel %vm104, %v743, 0
    %747 = vmatprep.subr.bf16.mxu0 0
    %748 = vmatpush1.bf16.msra.mxu0 %v329
    %749 = vmatprep.subr.bf16.mxu0 0
    %750 = vmatpush1.bf16.msra.mxu0 %v330
    %751 = vmatprep.subr.bf16.mxu0 0
    %752 = vmatpush1.bf16.msra.mxu0 0
    %753 = vmatprep.subr.bf16.mxu0 0
    %754 = vmatpush1.bf16.msra.mxu0 0
    %755 = vmatprep.subr.bf16.mxu0 0
    %756 = vmatpush1.bf16.msra.mxu0 0
    %757 = vmatprep.subr.bf16.mxu0 0
    %758 = vmatpush1.bf16.msra.mxu0 0
    %759 = vmatprep.subr.bf16.mxu0 0
    %760 = vmatpush1.bf16.msra.mxu0 0
    %761 = vmatprep.subr.bf16.mxu0 0
    %762 = vmatpush1.bf16.msra.mxu0 0
    %763 = vmatprep.subr.bf16.mxu0 0
    %764 = vmatpush1.bf16.msra.mxu0 0
    %765 = vmatprep.subr.bf16.mxu0 0
    %766 = vmatpush1.bf16.msra.mxu0 0
    %767 = vmatprep.subr.bf16.mxu0 0
    %768 = vmatpush1.bf16.msra.mxu0 0
    %769 = vmatprep.subr.bf16.mxu0 0
    %770 = vmatpush1.bf16.msra.mxu0 0
    %771 = vmatprep.subr.bf16.mxu0 0
    %772 = vmatpush1.bf16.msra.mxu0 0
    %773 = vmatprep.subr.bf16.mxu0 0
    %774 = vmatpush1.bf16.msra.mxu0 0
    %775 = vmatprep.subr.bf16.mxu0 0
    %776 = vmatpush1.bf16.msra.mxu0 0
    %777 = vmatprep.subr.bf16.mxu0 0
    %778 = vmatpush1.bf16.msra.mxu0 0
    %779 = vmatprep.mubr.bf16.mxu0 0
    %780 = vmatmul.mubr.bf16.gmra.mrb[0].mxu0 %v745
    %v781 = vpop.f32.mrb[0].mxu0
    %v782 = vadd.f32 0.0, %v781
    %v783 = vpop.f32.mrb[0].mxu0
    %v784 = vpop.f32.mrb[0].mxu0
    %v785 = vpop.f32.mrb[0].mxu0
    %786 = vdwg.mxu0
    %v787 = vadd.f32 %v739, %v782
    %v788 = vxor.u32 %v787, 2147483648
    %v789 = vmul.f32 %v788, 1.442695
    %v790 = vpow.pop %v789
    %v791 = vadd.f32 %v790, 1.0
    %v792 = vrcp.pop %v791
    %v793 = vmul.f32 1.0, %v792
    %v794 = vadd.f32 %v782, %v385
    %796 = vrot.lane.b32.xlu0 %v794, 64
    %v797 = vpop.permute.xlu0 %796
    %v799 = vmul.f32 %v793, %v797
    %801 = vrot.lane.b32.xlu0 %v799, 64
    %v802 = vpop.permute.xlu0 %801
    %v804 = vadd.f32 %v739, %v802
    %v805 = vtanh.pop %v804
    %v806 = vsub.f32 1.0, %v793
    %808 = vrot.lane.b32.xlu0 %v805, 96
    %v809 = vpop.permute.xlu0 %808
    %v811 = vmul.f32 %v806, %v809
    %v812 = vmul.f32 %v793, %v732
    %v813 = vadd.f32 %v811, %v812
    %815 = vrot.lane.b32.xlu0 %v813, 96
    %v816 = vpop.permute.xlu0 %815
    %818 = vst.msk [vmem:[#allocation3 + $0x28] sm:$0xff] %vm411, %v816
    %819 = vst.msk [vmem:[#allocation3 + $0x10] sm:$0xff] %vm413, %v816
    %v820 = vld [vmem:[#allocation2 + $0x30] sm:$0xff]
    %v821 = vpack.c.bf16 %v813, %v813
    %823 = vrot.lane.b32.xlu0 %v821, 96
    %v824 = vpop.permute.xlu0 %823
    %v826 = vsel %vm104, %v824, 0
    %828 = vmatprep.subr.bf16.mxu0 0
    %829 = vmatpush1.bf16.msra.mxu0 %v329
    %830 = vmatprep.subr.bf16.mxu0 0
    %831 = vmatpush1.bf16.msra.mxu0 %v330
    %832 = vmatprep.subr.bf16.mxu0 0
    %833 = vmatpush1.bf16.msra.mxu0 0
    %834 = vmatprep.subr.bf16.mxu0 0
    %835 = vmatpush1.bf16.msra.mxu0 0
    %836 = vmatprep.subr.bf16.mxu0 0
    %837 = vmatpush1.bf16.msra.mxu0 0
    %838 = vmatprep.subr.bf16.mxu0 0
    %839 = vmatpush1.bf16.msra.mxu0 0
    %840 = vmatprep.subr.bf16.mxu0 0
    %841 = vmatpush1.bf16.msra.mxu0 0
    %842 = vmatprep.subr.bf16.mxu0 0
    %843 = vmatpush1.bf16.msra.mxu0 0
    %844 = vmatprep.subr.bf16.mxu0 0
    %845 = vmatpush1.bf16.msra.mxu0 0
    %846 = vmatprep.subr.bf16.mxu0 0
    %847 = vmatpush1.bf16.msra.mxu0 0
    %848 = vmatprep.subr.bf16.mxu0 0
    %849 = vmatpush1.bf16.msra.mxu0 0
    %850 = vmatprep.subr.bf16.mxu0 0
    %851 = vmatpush1.bf16.msra.mxu0 0
    %852 = vmatprep.subr.bf16.mxu0 0
    %853 = vmatpush1.bf16.msra.mxu0 0
    %854 = vmatprep.subr.bf16.mxu0 0
    %855 = vmatpush1.bf16.msra.mxu0 0
    %856 = vmatprep.subr.bf16.mxu0 0
    %857 = vmatpush1.bf16.msra.mxu0 0
    %858 = vmatprep.subr.bf16.mxu0 0
    %859 = vmatpush1.bf16.msra.mxu0 0
    %860 = vmatprep.mubr.bf16.mxu0 0
    %861 = vmatmul.mubr.bf16.gmra.mrb[0].mxu0 %v826
    %v862 = vpop.f32.mrb[0].mxu0
    %v863 = vadd.f32 0.0, %v862
    %v864 = vpop.f32.mrb[0].mxu0
    %v865 = vpop.f32.mrb[0].mxu0
    %v866 = vpop.f32.mrb[0].mxu0
    %867 = vdwg.mxu0
    %v868 = vadd.f32 %v820, %v863
    %v869 = vxor.u32 %v868, 2147483648
    %v870 = vmul.f32 %v869, 1.442695
    %v871 = vpow.pop %v870
    %v872 = vadd.f32 %v871, 1.0
    %v873 = vrcp.pop %v872
    %v874 = vmul.f32 1.0, %v873
    %v875 = vadd.f32 %v863, %v385
    %877 = vrot.lane.b32.xlu0 %v875, 64
    %v878 = vpop.permute.xlu0 %877
    %v880 = vmul.f32 %v874, %v878
    %882 = vrot.lane.b32.xlu0 %v880, 64
    %v883 = vpop.permute.xlu0 %882
    %v885 = vadd.f32 %v820, %v883
    %v886 = vtanh.pop %v885
    %v887 = vsub.f32 1.0, %v874
    %889 = vrot.lane.b32.xlu0 %v886, 96
    %v890 = vpop.permute.xlu0 %889
    %v892 = vmul.f32 %v887, %v890
    %v893 = vmul.f32 %v874, %v813
    %v894 = vadd.f32 %v892, %v893
    %896 = vrot.lane.b32.xlu0 %v894, 96
    %v897 = vpop.permute.xlu0 %896
    %899 = vst.msk [vmem:[#allocation3 + $0x30] sm:$0xff] %vm411, %v897
    %900 = vst.msk [vmem:[#allocation3 + $0x8] sm:$0xff] %vm413, %v897
    %v901 = vld [vmem:[#allocation2 + $0x38] sm:$0xff]
    %v902 = vpack.c.bf16 %v894, %v894
    %904 = vrot.lane.b32.xlu0 %v902, 96
    %v905 = vpop.permute.xlu0 %904
    %v907 = vsel %vm104, %v905, 0
    %909 = vmatprep.subr.bf16.mxu0 0
    %910 = vmatpush1.bf16.msra.mxu0 %v329
    %911 = vmatprep.subr.bf16.mxu0 0
    %912 = vmatpush1.bf16.msra.mxu0 %v330
    %913 = vmatprep.subr.bf16.mxu0 0
    %914 = vmatpush1.bf16.msra.mxu0 0
    %915 = vmatprep.subr.bf16.mxu0 0
    %916 = vmatpush1.bf16.msra.mxu0 0
    %917 = vmatprep.subr.bf16.mxu0 0
    %918 = vmatpush1.bf16.msra.mxu0 0
    %919 = vmatprep.subr.bf16.mxu0 0
    %920 = vmatpush1.bf16.msra.mxu0 0
    %921 = vmatprep.subr.bf16.mxu0 0
    %922 = vmatpush1.bf16.msra.mxu0 0
    %923 = vmatprep.subr.bf16.mxu0 0
    %924 = vmatpush1.bf16.msra.mxu0 0
    %925 = vmatprep.subr.bf16.mxu0 0
    %926 = vmatpush1.bf16.msra.mxu0 0
    %927 = vmatprep.subr.bf16.mxu0 0
    %928 = vmatpush1.bf16.msra.mxu0 0
    %929 = vmatprep.subr.bf16.mxu0 0
    %930 = vmatpush1.bf16.msra.mxu0 0
    %931 = vmatprep.subr.bf16.mxu0 0
    %932 = vmatpush1.bf16.msra.mxu0 0
    %933 = vmatprep.subr.bf16.mxu0 0
    %934 = vmatpush1.bf16.msra.mxu0 0
    %935 = vmatprep.subr.bf16.mxu0 0
    %936 = vmatpush1.bf16.msra.mxu0 0
    %937 = vmatprep.subr.bf16.mxu0 0
    %938 = vmatpush1.bf16.msra.mxu0 0
    %939 = vmatprep.subr.bf16.mxu0 0
    %940 = vmatpush1.bf16.msra.mxu0 0
    %941 = vmatprep.mubr.bf16.mxu0 0
    %942 = vmatmul.mubr.bf16.gmra.mrb[0].mxu0 %v907
    %v943 = vpop.f32.mrb[0].mxu0
    %v944 = vadd.f32 0.0, %v943
    %v945 = vpop.f32.mrb[0].mxu0
    %v946 = vpop.f32.mrb[0].mxu0
    %v947 = vpop.f32.mrb[0].mxu0
    %948 = vdwg.mxu0
    %v949 = vadd.f32 %v901, %v944
    %v950 = vxor.u32 %v949, 2147483648
    %v951 = vmul.f32 %v950, 1.442695
    %v952 = vpow.pop %v951
    %v953 = vadd.f32 %v952, 1.0
    %v954 = vrcp.pop %v953
    %v955 = vmul.f32 1.0, %v954
    %v956 = vadd.f32 %v944, %v385
    %958 = vrot.lane.b32.xlu0 %v956, 64
    %v959 = vpop.permute.xlu0 %958
    %v961 = vmul.f32 %v955, %v959
    %963 = vrot.lane.b32.xlu0 %v961, 64
    %v964 = vpop.permute.xlu0 %963
    %v966 = vadd.f32 %v901, %v964
    %v967 = vtanh.pop %v966
    %v968 = vsub.f32 1.0, %v955
    %970 = vrot.lane.b32.xlu0 %v967, 96
    %v971 = vpop.permute.xlu0 %970
    %v973 = vmul.f32 %v968, %v971
    %v974 = vmul.f32 %v955, %v894
    %v975 = vadd.f32 %v973, %v974
    %977 = vrot.lane.b32.xlu0 %v975, 96
    %v978 = vpop.permute.xlu0 %977
    %980 = vst.msk [vmem:[#allocation3 + $0x38] sm:$0xff] %vm411, %v978
    %981 = vst.msk [vmem:[#allocation3] sm:$0xff] %vm413, %v978
    %v982 = vld [vmem:[#allocation3] sm:$0xff]
    %v983 = vld [vmem:[#allocation3 + $0x8] sm:$0xff]
    %v984 = vld [vmem:[#allocation3 + $0x10] sm:$0xff]
    %v985 = vld [vmem:[#allocation3 + $0x18] sm:$0xff]
    %v986 = vld [vmem:[#allocation3 + $0x20] sm:$0xff]
    %v987 = vld [vmem:[#allocation3 + $0x28] sm:$0xff]
    %v988 = vld [vmem:[#allocation3 + $0x30] sm:$0xff]
    %v989 = vld [vmem:[#allocation3 + $0x38] sm:$0xff]
    %v990 = vpack.c.bf16 %v983, %v982
    %v991 = vpack.c.bf16 %v985, %v984
    %v992 = vpack.c.bf16 %v987, %v986
    %v993 = vpack.c.bf16 %v989, %v988
    %v994 = vpack.c.bf16 %v988, %v989
    %v995 = vpack.c.bf16 %v986, %v987
    %v996 = vpack.c.bf16 %v984, %v985
    %v997 = vpack.c.bf16 %v982, %v983
    %s998 = scalar_lea.vmem %s2, 16
    %v999 = vld [vmem:[%s998] sm:$0xf]
    %v1000 = vld [vmem:[%s998 + $0x4] sm:$0xf]
    %v1001 = vld [vmem:[%s998 + $0x8] sm:$0xf]
    %v1002 = vld [vmem:[%s998 + $0xc] sm:$0xf]
    %s1003 = scalar_lea.vmem %s3, 16
    %v1004 = vld [vmem:[%s1003] sm:$0xf]
    %v1005 = vld [vmem:[%s1003 + $0x4] sm:$0xf]
    %v1006 = vld [vmem:[%s1003 + $0x8] sm:$0xf]
    %v1007 = vld [vmem:[%s1003 + $0xc] sm:$0xf]
    %v1012 = vunpack.c.l.b16 %v1004
    %v1013 = vunpack.c.l.b16 %v1005
    %v1014 = vunpack.c.l.b16 %v1006
    %v1015 = vunpack.c.l.b16 %v1007
    %v1016 = vpack.c.b16 %v1013, %v1012
    %v1017 = vpack.c.b16 %v1015, %v1014
    %v1021 = vsel %vm104, %v994, 0
    %v1024 = vsel %vm104, %v995, 0
    %v1027 = vsel %vm104, %v996, 0
    %v1030 = vsel %vm104, %v997, 0
    %1032 = vmatprep.subr.bf16.mxu0 0
    %1033 = vmatpush1.bf16.msra.mxu0 %v1016
    %1034 = vmatprep.subr.bf16.mxu0 0
    %1035 = vmatpush1.bf16.msra.mxu0 %v1017
    %1036 = vmatprep.subr.bf16.mxu0 0
    %1037 = vmatpush1.bf16.msra.mxu0 0
    %1038 = vmatprep.subr.bf16.mxu0 0
    %1039 = vmatpush1.bf16.msra.mxu0 0
    %1040 = vmatprep.subr.bf16.mxu0 0
    %1041 = vmatpush1.bf16.msra.mxu0 0
    %1042 = vmatprep.subr.bf16.mxu0 0
    %1043 = vmatpush1.bf16.msra.mxu0 0
    %1044 = vmatprep.subr.bf16.mxu0 0
    %1045 = vmatpush1.bf16.msra.mxu0 0
    %1046 = vmatprep.subr.bf16.mxu0 0
    %1047 = vmatpush1.bf16.msra.mxu0 0
    %1048 = vmatprep.subr.bf16.mxu0 0
    %1049 = vmatpush1.bf16.msra.mxu0 0
    %1050 = vmatprep.subr.bf16.mxu0 0
    %1051 = vmatpush1.bf16.msra.mxu0 0
    %1052 = vmatprep.subr.bf16.mxu0 0
    %1053 = vmatpush1.bf16.msra.mxu0 0
    %1054 = vmatprep.subr.bf16.mxu0 0
    %1055 = vmatpush1.bf16.msra.mxu0 0
    %1056 = vmatprep.subr.bf16.mxu0 0
    %1057 = vmatpush1.bf16.msra.mxu0 0
    %1058 = vmatprep.subr.bf16.mxu0 0
    %1059 = vmatpush1.bf16.msra.mxu0 0
    %1060 = vmatprep.subr.bf16.mxu0 0
    %1061 = vmatpush1.bf16.msra.mxu0 0
    %1062 = vmatprep.subr.bf16.mxu0 0
    %1063 = vmatpush1.bf16.msra.mxu0 0
    %1064 = vmatprep.mubr.bf16.mxu0 0
    %1065 = vmatmul.mubr.bf16.gmra.mrb[0].mxu0 %v1021
    %v1066 = vpop.f32.mrb[0].mxu0
    %v1067 = vadd.f32 0.0, %v1066
    %v1068 = vpop.f32.mrb[0].mxu0
    %v1069 = vpop.f32.mrb[0].mxu0
    %v1070 = vadd.f32 0.0, %v1069
    %v1071 = vpop.f32.mrb[0].mxu0
    %1072 = vmatprep.mubr.bf16.mxu0 0
    %1073 = vmatmul.mubr.bf16.gmra.mrb[0].mxu0 %v1024
    %v1074 = vpop.f32.mrb[0].mxu0
    %v1075 = vadd.f32 0.0, %v1074
    %v1076 = vpop.f32.mrb[0].mxu0
    %v1077 = vpop.f32.mrb[0].mxu0
    %v1078 = vadd.f32 0.0, %v1077
    %v1079 = vpop.f32.mrb[0].mxu0
    %1080 = vmatprep.mubr.bf16.mxu0 0
    %1081 = vmatmul.mubr.bf16.gmra.mrb[0].mxu0 %v1027
    %v1082 = vpop.f32.mrb[0].mxu0
    %v1083 = vadd.f32 0.0, %v1082
    %v1084 = vpop.f32.mrb[0].mxu0
    %v1085 = vpop.f32.mrb[0].mxu0
    %v1086 = vadd.f32 0.0, %v1085
    %v1087 = vpop.f32.mrb[0].mxu0
    %1088 = vmatprep.mubr.bf16.mxu0 0
    %1089 = vmatmul.mubr.bf16.gmra.mrb[0].mxu0 %v1030
    %v1090 = vpop.f32.mrb[0].mxu0
    %v1091 = vadd.f32 0.0, %v1090
    %v1092 = vpop.f32.mrb[0].mxu0
    %v1093 = vpop.f32.mrb[0].mxu0
    %v1094 = vadd.f32 0.0, %v1093
    %v1095 = vpop.f32.mrb[0].mxu0
    %1096 = vdwg.mxu0
    %v1101 = vunpack.c.l.b16 %v999
    %v1102 = vunpack.c.l.b16 %v1000
    %v1103 = vunpack.c.l.b16 %v1001
    %v1104 = vunpack.c.l.b16 %v1002
    %v1105 = vpack.c.b16 %v1102, %v1101
    %v1106 = vpack.c.b16 %v1104, %v1103
    %v1110 = vsel %vm104, %v990, 0
    %v1113 = vsel %vm104, %v991, 0
    %v1116 = vsel %vm104, %v992, 0
    %v1119 = vsel %vm104, %v993, 0
    %1121 = vmatprep.subr.bf16.mxu0 0
    %1122 = vmatpush1.bf16.msra.mxu0 %v1105
    %1123 = vmatprep.subr.bf16.mxu0 0
    %1124 = vmatpush1.bf16.msra.mxu0 %v1106
    %1125 = vmatprep.subr.bf16.mxu0 0
    %1126 = vmatpush1.bf16.msra.mxu0 0
    %1127 = vmatprep.subr.bf16.mxu0 0
    %1128 = vmatpush1.bf16.msra.mxu0 0
    %1129 = vmatprep.subr.bf16.mxu0 0
    %1130 = vmatpush1.bf16.msra.mxu0 0
    %1131 = vmatprep.subr.bf16.mxu0 0
    %1132 = vmatpush1.bf16.msra.mxu0 0
    %1133 = vmatprep.subr.bf16.mxu0 0
    %1134 = vmatpush1.bf16.msra.mxu0 0
    %1135 = vmatprep.subr.bf16.mxu0 0
    %1136 = vmatpush1.bf16.msra.mxu0 0
    %1137 = vmatprep.subr.bf16.mxu0 0
    %1138 = vmatpush1.bf16.msra.mxu0 0
    %1139 = vmatprep.subr.bf16.mxu0 0
    %1140 = vmatpush1.bf16.msra.mxu0 0
    %1141 = vmatprep.subr.bf16.mxu0 0
    %1142 = vmatpush1.bf16.msra.mxu0 0
    %1143 = vmatprep.subr.bf16.mxu0 0
    %1144 = vmatpush1.bf16.msra.mxu0 0
    %1145 = vmatprep.subr.bf16.mxu0 0
    %1146 = vmatpush1.bf16.msra.mxu0 0
    %1147 = vmatprep.subr.bf16.mxu0 0
    %1148 = vmatpush1.bf16.msra.mxu0 0
    %1149 = vmatprep.subr.bf16.mxu0 0
    %1150 = vmatpush1.bf16.msra.mxu0 0
    %1151 = vmatprep.subr.bf16.mxu0 0
    %1152 = vmatpush1.bf16.msra.mxu0 0
    %1153 = vmatprep.mubr.bf16.mxu0 0
    %1154 = vmatmul.mubr.bf16.gmra.mrb[0].mxu0 %v1110
    %v1155 = vpop.f32.mrb[0].mxu0
    %v1156 = vadd.f32 %v1067, %v1155
    %v1157 = vpop.f32.mrb[0].mxu0
    %v1158 = vpop.f32.mrb[0].mxu0
    %v1159 = vadd.f32 %v1070, %v1158
    %v1160 = vpop.f32.mrb[0].mxu0
    %1161 = vmatprep.mubr.bf16.mxu0 0
    %1162 = vmatmul.mubr.bf16.gmra.mrb[0].mxu0 %v1113
    %v1163 = vpop.f32.mrb[0].mxu0
    %v1164 = vadd.f32 %v1075, %v1163
    %v1165 = vpop.f32.mrb[0].mxu0
    %v1166 = vpop.f32.mrb[0].mxu0
    %v1167 = vadd.f32 %v1078, %v1166
    %v1168 = vpop.f32.mrb[0].mxu0
    %1169 = vmatprep.mubr.bf16.mxu0 0
    %1170 = vmatmul.mubr.bf16.gmra.mrb[0].mxu0 %v1116
    %v1171 = vpop.f32.mrb[0].mxu0
    %v1172 = vadd.f32 %v1083, %v1171
    %v1173 = vpop.f32.mrb[0].mxu0
    %v1174 = vpop.f32.mrb[0].mxu0
    %v1175 = vadd.f32 %v1086, %v1174
    %v1176 = vpop.f32.mrb[0].mxu0
    %1177 = vmatprep.mubr.bf16.mxu0 0
    %1178 = vmatmul.mubr.bf16.gmra.mrb[0].mxu0 %v1119
    %v1179 = vpop.f32.mrb[0].mxu0
    %v1180 = vadd.f32 %v1091, %v1179
    %v1181 = vpop.f32.mrb[0].mxu0
    %v1182 = vpop.f32.mrb[0].mxu0
    %v1183 = vadd.f32 %v1094, %v1182
    %v1184 = vpop.f32.mrb[0].mxu0
    %1185 = vdwg.mxu0
    %s1186 = scalar_lea.vmem %s5, 1
    %v1187 = vld [vmem:[%s1186] sm:$0x1]
    %v1189 = vlaneseq
    %v1190 = vshrl.u32 %v1189, 7
    %v1191 = vsub.s32 0, %v1190
    %v1192 = vrot.slane %v1187, %v1191
    %v1194 = vadd.f32 %v1156, %v1192
    %v1195 = vadd.f32 %v1159, %v1192
    %v1196 = vadd.f32 %v1164, %v1192
    %v1197 = vadd.f32 %v1167, %v1192
    %v1198 = vadd.f32 %v1172, %v1192
    %v1199 = vadd.f32 %v1175, %v1192
    %v1200 = vadd.f32 %v1180, %v1192
    %v1201 = vadd.f32 %v1183, %v1192
    %1202 = vst.msk [vmem:[#allocation2] sm:$0xff] %vm306, %v1194
    %1203 = vst.msk [vmem:[#allocation2 + $0x8] sm:$0xff] %vm306, %v1195
    %1204 = vst.msk [vmem:[#allocation2 + $0x10] sm:$0xff] %vm306, %v1196
    %1205 = vst.msk [vmem:[#allocation2 + $0x18] sm:$0xff] %vm306, %v1197
    %1206 = vst.msk [vmem:[#allocation2 + $0x20] sm:$0xff] %vm306, %v1198
    %1207 = vst.msk [vmem:[#allocation2 + $0x28] sm:$0xff] %vm306, %v1199
    %1208 = vst.msk [vmem:[#allocation2 + $0x30] sm:$0xff] %vm306, %v1200
    %1209 = vst.msk [vmem:[#allocation2 + $0x38] sm:$0xff] %vm306, %v1201
    %s1210 = scalar_lea.vmem %s4, 16
    %v1211 = vld [vmem:[%s1210] sm:$0xf]
    %v1212 = vld [vmem:[%s1210 + $0x4] sm:$0xf]
    %v1213 = vld [vmem:[%s1210 + $0x8] sm:$0xf]
    %v1214 = vld [vmem:[%s1210 + $0xc] sm:$0xf]
    %s1215 = scalar_lea.vmem %s6, 8
    %v1216 = vld [vmem:[%s1215] sm:$0xff]
    %v1217 = vld [vmem:[#allocation2] sm:$0xff]
    %v1222 = vunpack.c.l.b16 %v1211
    %v1223 = vunpack.c.l.b16 %v1212
    %v1224 = vunpack.c.l.b16 %v1213
    %v1225 = vunpack.c.l.b16 %v1214
    %v1226 = vpack.c.b16 %v1223, %v1222
    %v1227 = vpack.c.b16 %v1225, %v1224
    %1230 = vmatprep.subr.bf16.mxu0 0
    %1231 = vmatpush1.bf16.msra.mxu0 %v1226
    %1232 = vmatprep.subr.bf16.mxu0 0
    %1233 = vmatpush1.bf16.msra.mxu0 %v1227
    %1234 = vmatprep.subr.bf16.mxu0 0
    %1235 = vmatpush1.bf16.msra.mxu0 0
    %1236 = vmatprep.subr.bf16.mxu0 0
    %1237 = vmatpush1.bf16.msra.mxu0 0
    %1238 = vmatprep.subr.bf16.mxu0 0
    %1239 = vmatpush1.bf16.msra.mxu0 0
    %1240 = vmatprep.subr.bf16.mxu0 0
    %1241 = vmatpush1.bf16.msra.mxu0 0
    %1242 = vmatprep.subr.bf16.mxu0 0
    %1243 = vmatpush1.bf16.msra.mxu0 0
    %1244 = vmatprep.subr.bf16.mxu0 0
    %1245 = vmatpush1.bf16.msra.mxu0 0
    %1246 = vmatprep.subr.bf16.mxu0 0
    %1247 = vmatpush1.bf16.msra.mxu0 0
    %1248 = vmatprep.subr.bf16.mxu0 0
    %1249 = vmatpush1.bf16.msra.mxu0 0
    %1250 = vmatprep.subr.bf16.mxu0 0
    %1251 = vmatpush1.bf16.msra.mxu0 0
    %1252 = vmatprep.subr.bf16.mxu0 0
    %1253 = vmatpush1.bf16.msra.mxu0 0
    %1254 = vmatprep.subr.bf16.mxu0 0
    %1255 = vmatpush1.bf16.msra.mxu0 0
    %1256 = vmatprep.subr.bf16.mxu0 0
    %1257 = vmatpush1.bf16.msra.mxu0 0
    %1258 = vmatprep.subr.bf16.mxu0 0
    %1259 = vmatpush1.bf16.msra.mxu0 0
    %1260 = vmatprep.subr.bf16.mxu0 0
    %1261 = vmatpush1.bf16.msra.mxu0 0
    %1262 = vmatprep.mubr.bf16.mxu0 0
    %1263 = vmatmul.mubr.bf16.gmra.mrb[0].mxu0 %v334
    %v1264 = vpop.f32.mrb[0].mxu0
    %v1265 = vadd.f32 0.0, %v1264
    %v1266 = vpop.f32.mrb[0].mxu0
    %v1267 = vpop.f32.mrb[0].mxu0
    %v1268 = vpop.f32.mrb[0].mxu0
    %1269 = vdwg.mxu0
    %v1270 = vadd.f32 %v1217, %v1265
    %v1271 = vxor.u32 %v1270, 2147483648
    %v1272 = vmul.f32 %v1271, 1.442695
    %v1273 = vpow.pop %v1272
    %v1274 = vadd.f32 %v1273, 1.0
    %v1275 = vrcp.pop %v1274
    %v1276 = vmul.f32 1.0, %v1275
    %1278 = vrot.lane.b32.xlu0 %v1216, 64
    %v1279 = vpop.permute.xlu0 %1278
    %v1281 = vadd.f32 %v1265, %v1279
    %1283 = vrot.lane.b32.xlu0 %v1281, 64
    %v1284 = vpop.permute.xlu0 %1283
    %v1286 = vmul.f32 %v1276, %v1284
    %1288 = vrot.lane.b32.xlu0 %v1286, 64
    %v1289 = vpop.permute.xlu0 %1288
    %v1291 = vadd.f32 %v1217, %v1289
    %v1292 = vtanh.pop %v1291
    %v1293 = vsub.f32 1.0, %v1276
    %1295 = vrot.lane.b32.xlu0 %v1292, 96
    %v1296 = vpop.permute.xlu0 %1295
    %v1298 = vmul.f32 %v1293, %v1296
    %v1299 = vmul.f32 %v1276, 0.0
    %v1300 = vadd.f32 %v1298, %v1299
    %v1301 = vld [vmem:[#allocation2 + $0x8] sm:$0xff]
    %v1302 = vpack.c.bf16 %v1300, %v1300
    %1304 = vrot.lane.b32.xlu0 %v1302, 96
    %v1305 = vpop.permute.xlu0 %1304
    %v1307 = vsel %vm104, %v1305, 0
    %1309 = vmatprep.subr.bf16.mxu0 0
    %1310 = vmatpush1.bf16.msra.mxu0 %v1226
    %1311 = vmatprep.subr.bf16.mxu0 0
    %1312 = vmatpush1.bf16.msra.mxu0 %v1227
    %1313 = vmatprep.subr.bf16.mxu0 0
    %1314 = vmatpush1.bf16.msra.mxu0 0
    %1315 = vmatprep.subr.bf16.mxu0 0
    %1316 = vmatpush1.bf16.msra.mxu0 0
    %1317 = vmatprep.subr.bf16.mxu0 0
    %1318 = vmatpush1.bf16.msra.mxu0 0
    %1319 = vmatprep.subr.bf16.mxu0 0
    %1320 = vmatpush1.bf16.msra.mxu0 0
    %1321 = vmatprep.subr.bf16.mxu0 0
    %1322 = vmatpush1.bf16.msra.mxu0 0
    %1323 = vmatprep.subr.bf16.mxu0 0
    %1324 = vmatpush1.bf16.msra.mxu0 0
    %1325 = vmatprep.subr.bf16.mxu0 0
    %1326 = vmatpush1.bf16.msra.mxu0 0
    %1327 = vmatprep.subr.bf16.mxu0 0
    %1328 = vmatpush1.bf16.msra.mxu0 0
    %1329 = vmatprep.subr.bf16.mxu0 0
    %1330 = vmatpush1.bf16.msra.mxu0 0
    %1331 = vmatprep.subr.bf16.mxu0 0
    %1332 = vmatpush1.bf16.msra.mxu0 0
    %1333 = vmatprep.subr.bf16.mxu0 0
    %1334 = vmatpush1.bf16.msra.mxu0 0
    %1335 = vmatprep.subr.bf16.mxu0 0
    %1336 = vmatpush1.bf16.msra.mxu0 0
    %1337 = vmatprep.subr.bf16.mxu0 0
    %1338 = vmatpush1.bf16.msra.mxu0 0
    %1339 = vmatprep.subr.bf16.mxu0 0
    %1340 = vmatpush1.bf16.msra.mxu0 0
    %1341 = vmatprep.mubr.bf16.mxu0 0
    %1342 = vmatmul.mubr.bf16.gmra.mrb[0].mxu0 %v1307
    %v1343 = vpop.f32.mrb[0].mxu0
    %v1344 = vadd.f32 0.0, %v1343
    %v1345 = vpop.f32.mrb[0].mxu0
    %v1346 = vpop.f32.mrb[0].mxu0
    %v1347 = vpop.f32.mrb[0].mxu0
    %1348 = vdwg.mxu0
    %v1349 = vadd.f32 %v1301, %v1344
    %v1350 = vxor.u32 %v1349, 2147483648
    %v1351 = vmul.f32 %v1350, 1.442695
    %v1352 = vpow.pop %v1351
    %v1353 = vadd.f32 %v1352, 1.0
    %v1354 = vrcp.pop %v1353
    %v1355 = vmul.f32 1.0, %v1354
    %v1356 = vadd.f32 %v1344, %v1279
    %1358 = vrot.lane.b32.xlu0 %v1356, 64
    %v1359 = vpop.permute.xlu0 %1358
    %v1361 = vmul.f32 %v1355, %v1359
    %1363 = vrot.lane.b32.xlu0 %v1361, 64
    %v1364 = vpop.permute.xlu0 %1363
    %v1366 = vadd.f32 %v1301, %v1364
    %v1367 = vtanh.pop %v1366
    %v1368 = vsub.f32 1.0, %v1355
    %1370 = vrot.lane.b32.xlu0 %v1367, 96
    %v1371 = vpop.permute.xlu0 %1370
    %v1373 = vmul.f32 %v1368, %v1371
    %v1374 = vmul.f32 %v1355, %v1300
    %v1375 = vadd.f32 %v1373, %v1374
    %v1376 = vld [vmem:[#allocation2 + $0x10] sm:$0xff]
    %v1377 = vpack.c.bf16 %v1375, %v1375
    %1379 = vrot.lane.b32.xlu0 %v1377, 96
    %v1380 = vpop.permute.xlu0 %1379
    %v1382 = vsel %vm104, %v1380, 0
    %1384 = vmatprep.subr.bf16.mxu0 0
    %1385 = vmatpush1.bf16.msra.mxu0 %v1226
    %1386 = vmatprep.subr.bf16.mxu0 0
    %1387 = vmatpush1.bf16.msra.mxu0 %v1227
    %1388 = vmatprep.subr.bf16.mxu0 0
    %1389 = vmatpush1.bf16.msra.mxu0 0
    %1390 = vmatprep.subr.bf16.mxu0 0
    %1391 = vmatpush1.bf16.msra.mxu0 0
    %1392 = vmatprep.subr.bf16.mxu0 0
    %1393 = vmatpush1.bf16.msra.mxu0 0
    %1394 = vmatprep.subr.bf16.mxu0 0
    %1395 = vmatpush1.bf16.msra.mxu0 0
    %1396 = vmatprep.subr.bf16.mxu0 0
    %1397 = vmatpush1.bf16.msra.mxu0 0
    %1398 = vmatprep.subr.bf16.mxu0 0
    %1399 = vmatpush1.bf16.msra.mxu0 0
    %1400 = vmatprep.subr.bf16.mxu0 0
    %1401 = vmatpush1.bf16.msra.mxu0 0
    %1402 = vmatprep.subr.bf16.mxu0 0
    %1403 = vmatpush1.bf16.msra.mxu0 0
    %1404 = vmatprep.subr.bf16.mxu0 0
    %1405 = vmatpush1.bf16.msra.mxu0 0
    %1406 = vmatprep.subr.bf16.mxu0 0
    %1407 = vmatpush1.bf16.msra.mxu0 0
    %1408 = vmatprep.subr.bf16.mxu0 0
    %1409 = vmatpush1.bf16.msra.mxu0 0
    %1410 = vmatprep.subr.bf16.mxu0 0
    %1411 = vmatpush1.bf16.msra.mxu0 0
    %1412 = vmatprep.subr.bf16.mxu0 0
    %1413 = vmatpush1.bf16.msra.mxu0 0
    %1414 = vmatprep.subr.bf16.mxu0 0
    %1415 = vmatpush1.bf16.msra.mxu0 0
    %1416 = vmatprep.mubr.bf16.mxu0 0
    %1417 = vmatmul.mubr.bf16.gmra.mrb[0].mxu0 %v1382
    %v1418 = vpop.f32.mrb[0].mxu0
    %v1419 = vadd.f32 0.0, %v1418
    %v1420 = vpop.f32.mrb[0].mxu0
    %v1421 = vpop.f32.mrb[0].mxu0
    %v1422 = vpop.f32.mrb[0].mxu0
    %1423 = vdwg.mxu0
    %v1424 = vadd.f32 %v1376, %v1419
    %v1425 = vxor.u32 %v1424, 2147483648
    %v1426 = vmul.f32 %v1425, 1.442695
    %v1427 = vpow.pop %v1426
    %v1428 = vadd.f32 %v1427, 1.0
    %v1429 = vrcp.pop %v1428
    %v1430 = vmul.f32 1.0, %v1429
    %v1431 = vadd.f32 %v1419, %v1279
    %1433 = vrot.lane.b32.xlu0 %v1431, 64
    %v1434 = vpop.permute.xlu0 %1433
    %v1436 = vmul.f32 %v1430, %v1434
    %1438 = vrot.lane.b32.xlu0 %v1436, 64
    %v1439 = vpop.permute.xlu0 %1438
    %v1441 = vadd.f32 %v1376, %v1439
    %v1442 = vtanh.pop %v1441
    %v1443 = vsub.f32 1.0, %v1430
    %1445 = vrot.lane.b32.xlu0 %v1442, 96
    %v1446 = vpop.permute.xlu0 %1445
    %v1448 = vmul.f32 %v1443, %v1446
    %v1449 = vmul.f32 %v1430, %v1375
    %v1450 = vadd.f32 %v1448, %v1449
    %v1451 = vld [vmem:[#allocation2 + $0x18] sm:$0xff]
    %v1452 = vpack.c.bf16 %v1450, %v1450
    %1454 = vrot.lane.b32.xlu0 %v1452, 96
    %v1455 = vpop.permute.xlu0 %1454
    %v1457 = vsel %vm104, %v1455, 0
    %1459 = vmatprep.subr.bf16.mxu0 0
    %1460 = vmatpush1.bf16.msra.mxu0 %v1226
    %1461 = vmatprep.subr.bf16.mxu0 0
    %1462 = vmatpush1.bf16.msra.mxu0 %v1227
    %1463 = vmatprep.subr.bf16.mxu0 0
    %1464 = vmatpush1.bf16.msra.mxu0 0
    %1465 = vmatprep.subr.bf16.mxu0 0
    %1466 = vmatpush1.bf16.msra.mxu0 0
    %1467 = vmatprep.subr.bf16.mxu0 0
    %1468 = vmatpush1.bf16.msra.mxu0 0
    %1469 = vmatprep.subr.bf16.mxu0 0
    %1470 = vmatpush1.bf16.msra.mxu0 0
    %1471 = vmatprep.subr.bf16.mxu0 0
    %1472 = vmatpush1.bf16.msra.mxu0 0
    %1473 = vmatprep.subr.bf16.mxu0 0
    %1474 = vmatpush1.bf16.msra.mxu0 0
    %1475 = vmatprep.subr.bf16.mxu0 0
    %1476 = vmatpush1.bf16.msra.mxu0 0
    %1477 = vmatprep.subr.bf16.mxu0 0
    %1478 = vmatpush1.bf16.msra.mxu0 0
    %1479 = vmatprep.subr.bf16.mxu0 0
    %1480 = vmatpush1.bf16.msra.mxu0 0
    %1481 = vmatprep.subr.bf16.mxu0 0
    %1482 = vmatpush1.bf16.msra.mxu0 0
    %1483 = vmatprep.subr.bf16.mxu0 0
    %1484 = vmatpush1.bf16.msra.mxu0 0
    %1485 = vmatprep.subr.bf16.mxu0 0
    %1486 = vmatpush1.bf16.msra.mxu0 0
    %1487 = vmatprep.subr.bf16.mxu0 0
    %1488 = vmatpush1.bf16.msra.mxu0 0
    %1489 = vmatprep.subr.bf16.mxu0 0
    %1490 = vmatpush1.bf16.msra.mxu0 0
    %1491 = vmatprep.mubr.bf16.mxu0 0
    %1492 = vmatmul.mubr.bf16.gmra.mrb[0].mxu0 %v1457
    %v1493 = vpop.f32.mrb[0].mxu0
    %v1494 = vadd.f32 0.0, %v1493
    %v1495 = vpop.f32.mrb[0].mxu0
    %v1496 = vpop.f32.mrb[0].mxu0
    %v1497 = vpop.f32.mrb[0].mxu0
    %1498 = vdwg.mxu0
    %v1499 = vadd.f32 %v1451, %v1494
    %v1500 = vxor.u32 %v1499, 2147483648
    %v1501 = vmul.f32 %v1500, 1.442695
    %v1502 = vpow.pop %v1501
    %v1503 = vadd.f32 %v1502, 1.0
    %v1504 = vrcp.pop %v1503
    %v1505 = vmul.f32 1.0, %v1504
    %v1506 = vadd.f32 %v1494, %v1279
    %1508 = vrot.lane.b32.xlu0 %v1506, 64
    %v1509 = vpop.permute.xlu0 %1508
    %v1511 = vmul.f32 %v1505, %v1509
    %1513 = vrot.lane.b32.xlu0 %v1511, 64
    %v1514 = vpop.permute.xlu0 %1513
    %v1516 = vadd.f32 %v1451, %v1514
    %v1517 = vtanh.pop %v1516
    %v1518 = vsub.f32 1.0, %v1505
    %1520 = vrot.lane.b32.xlu0 %v1517, 96
    %v1521 = vpop.permute.xlu0 %1520
    %v1523 = vmul.f32 %v1518, %v1521
    %v1524 = vmul.f32 %v1505, %v1450
    %v1525 = vadd.f32 %v1523, %v1524
    %v1526 = vld [vmem:[#allocation2 + $0x20] sm:$0xff]
    %v1527 = vpack.c.bf16 %v1525, %v1525
    %1529 = vrot.lane.b32.xlu0 %v1527, 96
    %v1530 = vpop.permute.xlu0 %1529
    %v1532 = vsel %vm104, %v1530, 0
    %1534 = vmatprep.subr.bf16.mxu0 0
    %1535 = vmatpush1.bf16.msra.mxu0 %v1226
    %1536 = vmatprep.subr.bf16.mxu0 0
    %1537 = vmatpush1.bf16.msra.mxu0 %v1227
    %1538 = vmatprep.subr.bf16.mxu0 0
    %1539 = vmatpush1.bf16.msra.mxu0 0
    %1540 = vmatprep.subr.bf16.mxu0 0
    %1541 = vmatpush1.bf16.msra.mxu0 0
    %1542 = vmatprep.subr.bf16.mxu0 0
    %1543 = vmatpush1.bf16.msra.mxu0 0
    %1544 = vmatprep.subr.bf16.mxu0 0
    %1545 = vmatpush1.bf16.msra.mxu0 0
    %1546 = vmatprep.subr.bf16.mxu0 0
    %1547 = vmatpush1.bf16.msra.mxu0 0
    %1548 = vmatprep.subr.bf16.mxu0 0
    %1549 = vmatpush1.bf16.msra.mxu0 0
    %1550 = vmatprep.subr.bf16.mxu0 0
    %1551 = vmatpush1.bf16.msra.mxu0 0
    %1552 = vmatprep.subr.bf16.mxu0 0
    %1553 = vmatpush1.bf16.msra.mxu0 0
    %1554 = vmatprep.subr.bf16.mxu0 0
    %1555 = vmatpush1.bf16.msra.mxu0 0
    %1556 = vmatprep.subr.bf16.mxu0 0
    %1557 = vmatpush1.bf16.msra.mxu0 0
    %1558 = vmatprep.subr.bf16.mxu0 0
    %1559 = vmatpush1.bf16.msra.mxu0 0
    %1560 = vmatprep.subr.bf16.mxu0 0
    %1561 = vmatpush1.bf16.msra.mxu0 0
    %1562 = vmatprep.subr.bf16.mxu0 0
    %1563 = vmatpush1.bf16.msra.mxu0 0
    %1564 = vmatprep.subr.bf16.mxu0 0
    %1565 = vmatpush1.bf16.msra.mxu0 0
    %1566 = vmatprep.mubr.bf16.mxu0 0
    %1567 = vmatmul.mubr.bf16.gmra.mrb[0].mxu0 %v1532
    %v1568 = vpop.f32.mrb[0].mxu0
    %v1569 = vadd.f32 0.0, %v1568
    %v1570 = vpop.f32.mrb[0].mxu0
    %v1571 = vpop.f32.mrb[0].mxu0
    %v1572 = vpop.f32.mrb[0].mxu0
    %1573 = vdwg.mxu0
    %v1574 = vadd.f32 %v1526, %v1569
    %v1575 = vxor.u32 %v1574, 2147483648
    %v1576 = vmul.f32 %v1575, 1.442695
    %v1577 = vpow.pop %v1576
    %v1578 = vadd.f32 %v1577, 1.0
    %v1579 = vrcp.pop %v1578
    %v1580 = vmul.f32 1.0, %v1579
    %v1581 = vadd.f32 %v1569, %v1279
    %1583 = vrot.lane.b32.xlu0 %v1581, 64
    %v1584 = vpop.permute.xlu0 %1583
    %v1586 = vmul.f32 %v1580, %v1584
    %1588 = vrot.lane.b32.xlu0 %v1586, 64
    %v1589 = vpop.permute.xlu0 %1588
    %v1591 = vadd.f32 %v1526, %v1589
    %v1592 = vtanh.pop %v1591
    %v1593 = vsub.f32 1.0, %v1580
    %1595 = vrot.lane.b32.xlu0 %v1592, 96
    %v1596 = vpop.permute.xlu0 %1595
    %v1598 = vmul.f32 %v1593, %v1596
    %v1599 = vmul.f32 %v1580, %v1525
    %v1600 = vadd.f32 %v1598, %v1599
    %v1601 = vld [vmem:[#allocation2 + $0x28] sm:$0xff]
    %v1602 = vpack.c.bf16 %v1600, %v1600
    %1604 = vrot.lane.b32.xlu0 %v1602, 96
    %v1605 = vpop.permute.xlu0 %1604
    %v1607 = vsel %vm104, %v1605, 0
    %1609 = vmatprep.subr.bf16.mxu0 0
    %1610 = vmatpush1.bf16.msra.mxu0 %v1226
    %1611 = vmatprep.subr.bf16.mxu0 0
    %1612 = vmatpush1.bf16.msra.mxu0 %v1227
    %1613 = vmatprep.subr.bf16.mxu0 0
    %1614 = vmatpush1.bf16.msra.mxu0 0
    %1615 = vmatprep.subr.bf16.mxu0 0
    %1616 = vmatpush1.bf16.msra.mxu0 0
    %1617 = vmatprep.subr.bf16.mxu0 0
    %1618 = vmatpush1.bf16.msra.mxu0 0
    %1619 = vmatprep.subr.bf16.mxu0 0
    %1620 = vmatpush1.bf16.msra.mxu0 0
    %1621 = vmatprep.subr.bf16.mxu0 0
    %1622 = vmatpush1.bf16.msra.mxu0 0
    %1623 = vmatprep.subr.bf16.mxu0 0
    %1624 = vmatpush1.bf16.msra.mxu0 0
    %1625 = vmatprep.subr.bf16.mxu0 0
    %1626 = vmatpush1.bf16.msra.mxu0 0
    %1627 = vmatprep.subr.bf16.mxu0 0
    %1628 = vmatpush1.bf16.msra.mxu0 0
    %1629 = vmatprep.subr.bf16.mxu0 0
    %1630 = vmatpush1.bf16.msra.mxu0 0
    %1631 = vmatprep.subr.bf16.mxu0 0
    %1632 = vmatpush1.bf16.msra.mxu0 0
    %1633 = vmatprep.subr.bf16.mxu0 0
    %1634 = vmatpush1.bf16.msra.mxu0 0
    %1635 = vmatprep.subr.bf16.mxu0 0
    %1636 = vmatpush1.bf16.msra.mxu0 0
    %1637 = vmatprep.subr.bf16.mxu0 0
    %1638 = vmatpush1.bf16.msra.mxu0 0
    %1639 = vmatprep.subr.bf16.mxu0 0
    %1640 = vmatpush1.bf16.msra.mxu0 0
    %1641 = vmatprep.mubr.bf16.mxu0 0
    %1642 = vmatmul.mubr.bf16.gmra.mrb[0].mxu0 %v1607
    %v1643 = vpop.f32.mrb[0].mxu0
    %v1644 = vadd.f32 0.0, %v1643
    %v1645 = vpop.f32.mrb[0].mxu0
    %v1646 = vpop.f32.mrb[0].mxu0
    %v1647 = vpop.f32.mrb[0].mxu0
    %1648 = vdwg.mxu0
    %v1649 = vadd.f32 %v1601, %v1644
    %v1650 = vxor.u32 %v1649, 2147483648
    %v1651 = vmul.f32 %v1650, 1.442695
    %v1652 = vpow.pop %v1651
    %v1653 = vadd.f32 %v1652, 1.0
    %v1654 = vrcp.pop %v1653
    %v1655 = vmul.f32 1.0, %v1654
    %v1656 = vadd.f32 %v1644, %v1279
    %1658 = vrot.lane.b32.xlu0 %v1656, 64
    %v1659 = vpop.permute.xlu0 %1658
    %v1661 = vmul.f32 %v1655, %v1659
    %1663 = vrot.lane.b32.xlu0 %v1661, 64
    %v1664 = vpop.permute.xlu0 %1663
    %v1666 = vadd.f32 %v1601, %v1664
    %v1667 = vtanh.pop %v1666
    %v1668 = vsub.f32 1.0, %v1655
    %1670 = vrot.lane.b32.xlu0 %v1667, 96
    %v1671 = vpop.permute.xlu0 %1670
    %v1673 = vmul.f32 %v1668, %v1671
    %v1674 = vmul.f32 %v1655, %v1600
    %v1675 = vadd.f32 %v1673, %v1674
    %v1676 = vld [vmem:[#allocation2 + $0x30] sm:$0xff]
    %v1677 = vpack.c.bf16 %v1675, %v1675
    %1679 = vrot.lane.b32.xlu0 %v1677, 96
    %v1680 = vpop.permute.xlu0 %1679
    %v1682 = vsel %vm104, %v1680, 0
    %1684 = vmatprep.subr.bf16.mxu0 0
    %1685 = vmatpush1.bf16.msra.mxu0 %v1226
    %1686 = vmatprep.subr.bf16.mxu0 0
    %1687 = vmatpush1.bf16.msra.mxu0 %v1227
    %1688 = vmatprep.subr.bf16.mxu0 0
    %1689 = vmatpush1.bf16.msra.mxu0 0
    %1690 = vmatprep.subr.bf16.mxu0 0
    %1691 = vmatpush1.bf16.msra.mxu0 0
    %1692 = vmatprep.subr.bf16.mxu0 0
    %1693 = vmatpush1.bf16.msra.mxu0 0
    %1694 = vmatprep.subr.bf16.mxu0 0
    %1695 = vmatpush1.bf16.msra.mxu0 0
    %1696 = vmatprep.subr.bf16.mxu0 0
    %1697 = vmatpush1.bf16.msra.mxu0 0
    %1698 = vmatprep.subr.bf16.mxu0 0
    %1699 = vmatpush1.bf16.msra.mxu0 0
    %1700 = vmatprep.subr.bf16.mxu0 0
    %1701 = vmatpush1.bf16.msra.mxu0 0
    %1702 = vmatprep.subr.bf16.mxu0 0
    %1703 = vmatpush1.bf16.msra.mxu0 0
    %1704 = vmatprep.subr.bf16.mxu0 0
    %1705 = vmatpush1.bf16.msra.mxu0 0
    %1706 = vmatprep.subr.bf16.mxu0 0
    %1707 = vmatpush1.bf16.msra.mxu0 0
    %1708 = vmatprep.subr.bf16.mxu0 0
    %1709 = vmatpush1.bf16.msra.mxu0 0
    %1710 = vmatprep.subr.bf16.mxu0 0
    %1711 = vmatpush1.bf16.msra.mxu0 0
    %1712 = vmatprep.subr.bf16.mxu0 0
    %1713 = vmatpush1.bf16.msra.mxu0 0
    %1714 = vmatprep.subr.bf16.mxu0 0
    %1715 = vmatpush1.bf16.msra.mxu0 0
    %1716 = vmatprep.mubr.bf16.mxu0 0
    %1717 = vmatmul.mubr.bf16.gmra.mrb[0].mxu0 %v1682
    %v1718 = vpop.f32.mrb[0].mxu0
    %v1719 = vadd.f32 0.0, %v1718
    %v1720 = vpop.f32.mrb[0].mxu0
    %v1721 = vpop.f32.mrb[0].mxu0
    %v1722 = vpop.f32.mrb[0].mxu0
    %1723 = vdwg.mxu0
    %v1724 = vadd.f32 %v1676, %v1719
    %v1725 = vxor.u32 %v1724, 2147483648
    %v1726 = vmul.f32 %v1725, 1.442695
    %v1727 = vpow.pop %v1726
    %v1728 = vadd.f32 %v1727, 1.0
    %v1729 = vrcp.pop %v1728
    %v1730 = vmul.f32 1.0, %v1729
    %v1731 = vadd.f32 %v1719, %v1279
    %1733 = vrot.lane.b32.xlu0 %v1731, 64
    %v1734 = vpop.permute.xlu0 %1733
    %v1736 = vmul.f32 %v1730, %v1734
    %1738 = vrot.lane.b32.xlu0 %v1736, 64
    %v1739 = vpop.permute.xlu0 %1738
    %v1741 = vadd.f32 %v1676, %v1739
    %v1742 = vtanh.pop %v1741
    %v1743 = vsub.f32 1.0, %v1730
    %1745 = vrot.lane.b32.xlu0 %v1742, 96
    %v1746 = vpop.permute.xlu0 %1745
    %v1748 = vmul.f32 %v1743, %v1746
    %v1749 = vmul.f32 %v1730, %v1675
    %v1750 = vadd.f32 %v1748, %v1749
    %v1751 = vld [vmem:[#allocation2 + $0x38] sm:$0xff]
    %v1752 = vpack.c.bf16 %v1750, %v1750
    %1754 = vrot.lane.b32.xlu0 %v1752, 96
    %v1755 = vpop.permute.xlu0 %1754
    %v1757 = vsel %vm104, %v1755, 0
    %1759 = vmatprep.subr.bf16.mxu0 0
    %1760 = vmatpush1.bf16.msra.mxu0 %v1226
    %1761 = vmatprep.subr.bf16.mxu0 0
    %1762 = vmatpush1.bf16.msra.mxu0 %v1227
    %1763 = vmatprep.subr.bf16.mxu0 0
    %1764 = vmatpush1.bf16.msra.mxu0 0
    %1765 = vmatprep.subr.bf16.mxu0 0
    %1766 = vmatpush1.bf16.msra.mxu0 0
    %1767 = vmatprep.subr.bf16.mxu0 0
    %1768 = vmatpush1.bf16.msra.mxu0 0
    %1769 = vmatprep.subr.bf16.mxu0 0
    %1770 = vmatpush1.bf16.msra.mxu0 0
    %1771 = vmatprep.subr.bf16.mxu0 0
    %1772 = vmatpush1.bf16.msra.mxu0 0
    %1773 = vmatprep.subr.bf16.mxu0 0
    %1774 = vmatpush1.bf16.msra.mxu0 0
    %1775 = vmatprep.subr.bf16.mxu0 0
    %1776 = vmatpush1.bf16.msra.mxu0 0
    %1777 = vmatprep.subr.bf16.mxu0 0
    %1778 = vmatpush1.bf16.msra.mxu0 0
    %1779 = vmatprep.subr.bf16.mxu0 0
    %1780 = vmatpush1.bf16.msra.mxu0 0
    %1781 = vmatprep.subr.bf16.mxu0 0
    %1782 = vmatpush1.bf16.msra.mxu0 0
    %1783 = vmatprep.subr.bf16.mxu0 0
    %1784 = vmatpush1.bf16.msra.mxu0 0
    %1785 = vmatprep.subr.bf16.mxu0 0
    %1786 = vmatpush1.bf16.msra.mxu0 0
    %1787 = vmatprep.subr.bf16.mxu0 0
    %1788 = vmatpush1.bf16.msra.mxu0 0
    %1789 = vmatprep.subr.bf16.mxu0 0
    %1790 = vmatpush1.bf16.msra.mxu0 0
    %1791 = vmatprep.mubr.bf16.mxu0 0
    %1792 = vmatmul.mubr.bf16.gmra.mrb[0].mxu0 %v1757
    %v1793 = vpop.f32.mrb[0].mxu0
    %v1794 = vadd.f32 0.0, %v1793
    %v1795 = vpop.f32.mrb[0].mxu0
    %v1796 = vpop.f32.mrb[0].mxu0
    %v1797 = vpop.f32.mrb[0].mxu0
    %1798 = vdwg.mxu0
    %v1799 = vadd.f32 %v1751, %v1794
    %v1800 = vxor.u32 %v1799, 2147483648
    %v1801 = vmul.f32 %v1800, 1.442695
    %v1802 = vpow.pop %v1801
    %v1803 = vadd.f32 %v1802, 1.0
    %v1804 = vrcp.pop %v1803
    %v1805 = vmul.f32 1.0, %v1804
    %v1806 = vadd.f32 %v1794, %v1279
    %1808 = vrot.lane.b32.xlu0 %v1806, 64
    %v1809 = vpop.permute.xlu0 %1808
    %v1811 = vmul.f32 %v1805, %v1809
    %1813 = vrot.lane.b32.xlu0 %v1811, 64
    %v1814 = vpop.permute.xlu0 %1813
    %v1816 = vadd.f32 %v1751, %v1814
    %v1817 = vtanh.pop %v1816
    %v1818 = vsub.f32 1.0, %v1805
    %1820 = vrot.lane.b32.xlu0 %v1817, 96
    %v1821 = vpop.permute.xlu0 %1820
    %v1823 = vmul.f32 %v1818, %v1821
    %v1824 = vmul.f32 %v1805, %v1750
    %v1825 = vadd.f32 %v1823, %v1824
    %v1826 = vld [vmem:[#allocation4] sm:$0xff]
    %v1827 = vld [vmem:[#allocation4 + $0x8] sm:$0xff]
    %v1828 = vld [vmem:[#allocation4 + $0x10] sm:$0xff]
    %v1829 = vld [vmem:[#allocation4 + $0x18] sm:$0xff]
    %v1830 = vld [vmem:[%s8] sm:$0x1]
    %v1832 = vlaneseq
    %v1833 = vshrl.u32 %v1832, 7
    %v1834 = vsub.s32 0, %v1833
    %v1835 = vrot.slane %v1830, %v1834
    %1838 = vrot.lane.b32.xlu0 %v1825, 96
    %v1839 = vpop.permute.xlu0 %1838
    %v1840 = vsel %vm104, %v1839, 0
    %1842 = vmatprep.subr.mxu0 0.0
    %1843 = vmatpush1.msra.mxu0 %v1826
    %1844 = vmatprep.subr.mxu0 0.0
    %1845 = vmatpush1.msra.mxu0 %v1827
    %1846 = vmatprep.subr.mxu0 0.0
    %1847 = vmatpush1.msra.mxu0 %v1828
    %1848 = vmatprep.subr.mxu0 0.0
    %1849 = vmatpush1.msra.mxu0 %v1829
    %1850 = vmatprep.subr.mxu0 0.0
    %1851 = vmatpush1.msra.mxu0 0.0
    %1852 = vmatprep.subr.mxu0 0.0
    %1853 = vmatpush1.msra.mxu0 0.0
    %1854 = vmatprep.subr.mxu0 0.0
    %1855 = vmatpush1.msra.mxu0 0.0
    %1856 = vmatprep.subr.mxu0 0.0
    %1857 = vmatpush1.msra.mxu0 0.0
    %1858 = vmatprep.subr.mxu0 0.0
    %1859 = vmatpush1.msra.mxu0 0.0
    %1860 = vmatprep.subr.mxu0 0.0
    %1861 = vmatpush1.msra.mxu0 0.0
    %1862 = vmatprep.subr.mxu0 0.0
    %1863 = vmatpush1.msra.mxu0 0.0
    %1864 = vmatprep.subr.mxu0 0.0
    %1865 = vmatpush1.msra.mxu0 0.0
    %1866 = vmatprep.subr.mxu0 0.0
    %1867 = vmatpush1.msra.mxu0 0.0
    %1868 = vmatprep.subr.mxu0 0.0
    %1869 = vmatpush1.msra.mxu0 0.0
    %1870 = vmatprep.subr.mxu0 0.0
    %1871 = vmatpush1.msra.mxu0 0.0
    %1872 = vmatprep.subr.mxu0 0.0
    %1873 = vmatpush1.msra.mxu0 0.0
    %1874 = vmatprep.subr.mxu0 0.0
    %1875 = vmatpush1.msra.mxu0 0.0
    %1876 = vmatprep.subr.mxu0 0.0
    %1877 = vmatpush1.msra.mxu0 0.0
    %1878 = vmatprep.subr.mxu0 0.0
    %1879 = vmatpush1.msra.mxu0 0.0
    %1880 = vmatprep.subr.mxu0 0.0
    %1881 = vmatpush1.msra.mxu0 0.0
    %1882 = vmatprep.subr.mxu0 0.0
    %1883 = vmatpush1.msra.mxu0 0.0
    %1884 = vmatprep.subr.mxu0 0.0
    %1885 = vmatpush1.msra.mxu0 0.0
    %1886 = vmatprep.subr.mxu0 0.0
    %1887 = vmatpush1.msra.mxu0 0.0
    %1888 = vmatprep.subr.mxu0 0.0
    %1889 = vmatpush1.msra.mxu0 0.0
    %1890 = vmatprep.subr.mxu0 0.0
    %1891 = vmatpush1.msra.mxu0 0.0
    %1892 = vmatprep.subr.mxu0 0.0
    %1893 = vmatpush1.msra.mxu0 0.0
    %1894 = vmatprep.subr.mxu0 0.0
    %1895 = vmatpush1.msra.mxu0 0.0
    %1896 = vmatprep.subr.mxu0 0.0
    %1897 = vmatpush1.msra.mxu0 0.0
    %1898 = vmatprep.subr.mxu0 0.0
    %1899 = vmatpush1.msra.mxu0 0.0
    %1900 = vmatprep.subr.mxu0 0.0
    %1901 = vmatpush1.msra.mxu0 0.0
    %1902 = vmatprep.subr.mxu0 0.0
    %1903 = vmatpush1.msra.mxu0 0.0
    %1904 = vmatprep.subr.mxu0 0.0
    %1905 = vmatpush1.msra.mxu0 0.0
    %1906 = vmatprep.mubr.f32.mxu0 0.0
    %1907 = vmatmul.mubr.f32.gmra.mrb[0].mxu0 %v1840
    %v1908 = vpop.f32.mrb[0].mxu0
    %v1909 = vadd.f32 %v1835, %v1908
    %v1910 = vpop.f32.mrb[0].mxu0
    %1911 = vdwg.mxu0
    %1912 = vst [vmem:[#allocation7] sm:$0xff] %v1909
    // Predicated region
    $region42: #{tpu_custom_call.1} parent=1 // pred_check
      _
    $region43: #{tpu_custom_call.1} parent=1 // pred_check_branch
      %1914 = sbr.rel (0) target = $region45
    $region44: #{tpu_custom_call.1} parent=1 // pred_region
      %s1916 = ssub.s32 128, 128
      %1917 = vsyncadd [#allocation6], %s1916
      %s1919 = sshll.u32 [#allocation7], 4
      %s1920 = int_to_ptr.vmem [resolvable:$true] %s1919
      %1922 = dma.vmem_to_hbm [thread:$0]  %s1920, 128, %s9, [#allocation6]
    $region45: #{tpu_custom_call.1} parent=1 // pred_fallthru
      _
    // Predicated region
    $region46: #{tpu_custom_call.1} parent=1 // pred_check
      _
    $region47: #{tpu_custom_call.1} parent=1 // pred_check_branch
      %1924 = sbr.rel (0) target = $region49
    $region48: #{tpu_custom_call.1} parent=1 // pred_region
      %1925 = dma.done [#allocation6], 128
    $region49: #{tpu_custom_call.1} parent=1 // pred_fallthru
      _
    %1926 = vsyncpa [#allocation5], 1
    %1927 = vsyncpa [#allocation6], 1

</llo_original>
